<compile_context>
chip_gen: v6e
topology: v6e:2x2x1
jax: 0.10.0
libtpu: 0.0.40
codegen_flags: <defaults>
</compile_context>

<pallas_src>
import functools
from math import sqrt

import jax
import jax.numpy as jnp
from jax import lax
from jax.experimental import pallas as pl
from jax.experimental.pallas import tpu as pltpu

_COMPUTE_DTYPE = jnp.bfloat16  # MXU operand / HBM stream dtype (f32 accum)


def _round_up(x, m):
    return (x + m - 1) // m * m


def _sigmoid(x):
    # One EUP op (tanh) + cheap VPU ops instead of a possible exp+recip pair.
    return 0.5 * (1.0 + jnp.tanh(0.5 * x))


def _lstm_recurrent_kernel(gx_ref, b_ref, whh_ref, out_ref, h_scr, c_scr, *,
                           chunk_t, hidden_pad, seq_len, need_mask, unroll):
    """Recurrent half of one LSTM direction; one time-chunk per grid step.

    Grid: (num_directions, num_time_chunks)
      axis 0 ("parallel")  : direction (0 = forward, 1 = backward)
      axis 1 ("arbitrary") : time chunks, processed sequentially

    gx_ref  : (chunk_t, Bp, 4*Hp) bf16  precomputed x@W_ih (no bias), padded
    b_ref   : (1, 4*Hp)           f32   bias (b_ih + b_hh), gate-padded
    whh_ref : (Hp, 4*Hp)          bf16  recurrent weight, gate-padded
    out_ref : (chunk_t, Bp, Hp)   bf16  hidden states of this chunk
    h_scr/c_scr : (Bp, Hp) f32          recurrent state carried across chunks
    """
    d = pl.program_id(0)
    tc = pl.program_id(1)
    nc = pl.num_programs(1)

    @pl.when(tc == 0)
    def _():
        h_scr[...] = jnp.zeros_like(h_scr)
        c_scr[...] = jnp.zeros_like(c_scr)

    whh = whh_ref[...]          # (Hp, 4*Hp) bf16, reused every step
    bias = b_ref[...]           # (1, 4*Hp)  f32
    Hp = hidden_pad
    # Which original time-chunk this grid step maps to (backward walks chunks
    # in reverse), converted to a global time offset for the padding mask.
    chunk_base = (d * (nc - 1) + (1 - 2 * d) * tc) * chunk_t

    def step(t, carry):
        # forward walks the chunk 0..chunk_t-1, backward walks chunk_t-1..0;
        # outputs are written back at the same position, so the backward
        # direction's outputs come out already in natural time order.
        tt = d * (chunk_t - 1) + (1 - 2 * d) * t
        gates = (gx_ref[tt].astype(jnp.float32) + bias
                 + jnp.dot(h_scr[...].astype(whh.dtype), whh,
                           preferred_element_type=jnp.float32))  # (Bp,4Hp) f32
        i = _sigmoid(gates[:, 0 * Hp:1 * Hp])     # lane-aligned slices
        f = _sigmoid(gates[:, 1 * Hp:2 * Hp])
        g = jnp.tanh(gates[:, 2 * Hp:3 * Hp])
        o = _sigmoid(gates[:, 3 * Hp:4 * Hp])
        c_new = f * c_scr[...] + i * g
        h_new = o * jnp.tanh(c_new)

        def commit():
            c_scr[...] = c_new
            h_scr[...] = h_new
            out_ref[tt] = h_new.astype(out_ref.dtype)

        if need_mask:
            # Padded timesteps (global_t >= seq_len) carry bias-only gates;
            # skip the state update so the backward direction (which visits
            # them first) keeps its zero initial state through them.
            pl.when(chunk_base + tt < seq_len)(commit)
        else:
            commit()
        return carry

    lax.fori_loop(0, chunk_t, step, 0, unroll=unroll)


def lstm_layer(x_tbd, dir_params, hidden):
    """One (possibly bidirectional) LSTM layer.

    x_tbd      : (T, B, D) time-major (any float dtype)
    dir_params : list over directions of (w_ih (4H,D), w_hh (4H,H), b_ih, b_hh)
    returns    : (T, B, hidden * num_directions) bf16
    """
    T, B, D = x_tbd.shape
    H = hidden
    nd = len(dir_params)

    Hp = _round_up(H, 128)   # lane-aligned gate blocks + dense output stores
    Bp = _round_up(B, 8)     # full sublanes for the MXU M dim

    # Generation-aware VMEM budget: ~half of capacity (64 MiB on v5e/v6e's
    # 128 MiB, 32 MiB on v7x's 64 MiB/TC).
    try:
        vmem_cap = pltpu.get_tpu_info().vmem_capacity_bytes
    except Exception:
        vmem_cap = 128 * 1024 * 1024
    vmem_budget = max(24 << 20, min(vmem_cap // 2, 64 << 20))

    # Per-chunk VMEM: bf16 gx + bf16 out, double-buffered; W_hh single-buffer.
    fixed_bytes = Hp * 4 * Hp * 2 + 2 * Bp * Hp * 4 + 2 * (4 * Hp * 4)
    per_t_bytes = Bp * (4 * Hp + Hp) * 2 * 2
    avail = max(vmem_budget - fixed_bytes, per_t_bytes * 8)
    max_ct = max(8, min(512, (avail // per_t_bytes) // 8 * 8))
    chunk_t = min(_round_up(T, 8), max_ct)
    Tp = _round_up(T, chunk_t)
    nc = Tp // chunk_t

    # Pad the (small) input once, cast to bf16 once.  Padded time/batch rows
    # are zero, so the hoisted matmul already yields zero pre-bias gates for
    # them (the bias is added in-kernel; padded steps are masked there).
    x_p = jnp.pad(x_tbd.astype(_COMPUTE_DTYPE),
                  ((0, Tp - T), (0, Bp - B), (0, 0)))

    w_ih_cols, whh_list, b_list = [], [], []
    for (w_ih, w_hh, b_ih, b_hh) in dir_params:
        w_ih = jnp.asarray(w_ih, jnp.float32)
        w_hh = jnp.asarray(w_hh, jnp.float32)
        b = jnp.asarray(b_ih, jnp.float32) + jnp.asarray(b_hh, jnp.float32)

        # Pad each of the 4 gate blocks H -> Hp so in-kernel gate slices sit
        # on 128-lane tile boundaries (padded lanes stay at h = c = 0).
        w_ih_p = jnp.pad(w_ih.reshape(4, H, D),
                         ((0, 0), (0, Hp - H), (0, 0))).reshape(4 * Hp, D)
        w_ih_cols.append(w_ih_p.T)                                # (D, 4*Hp)
        b_list.append(jnp.pad(b.reshape(4, H),
                              ((0, 0), (0, Hp - H))).reshape(1, 4 * Hp))
        whh_p = jnp.pad(w_hh.T.reshape(H, 4, H),
                        ((0, Hp - H), (0, 0), (0, Hp - H))).reshape(Hp, 4 * Hp)
        whh_list.append(whh_p.astype(_COMPUTE_DTYPE))

    # One hoisted input projection for ALL directions: (Tp*Bp, D) @ (D, nd*4*Hp)
    # bf16 operands, f32 accumulation, bf16 result (halves the dominant HBM
    # stream and the double-buffered VMEM block).
    w_stack = jnp.concatenate(w_ih_cols, axis=1).astype(_COMPUTE_DTYPE)
    gx_all = jnp.dot(x_p.reshape(Tp * Bp, D), w_stack,
                     preferred_element_type=jnp.float32
                     ).astype(_COMPUTE_DTYPE).reshape(Tp, Bp, nd * 4 * Hp)
    b_all = jnp.stack(b_list)                      # (nd, 1, 4*Hp)  f32
    whh_all = jnp.stack(whh_list)                  # (nd, Hp, 4*Hp) bf16

    # Backward direction (d == 1) visits chunks in reverse order, reading and
    # writing the matching original time positions (no HBM reverse copies).
    def chunk_idx(d, tc):
        return d * (nc - 1) + (1 - 2 * d) * tc

    kernel = functools.partial(
        _lstm_recurrent_kernel, chunk_t=chunk_t, hidden_pad=Hp, seq_len=T,
        need_mask=(Tp != T), unroll=min(8, chunk_t))

    out = pl.pallas_call(
        kernel,
        out_shape=jax.ShapeDtypeStruct((Tp, Bp, nd * Hp), _COMPUTE_DTYPE),
        grid_spec=pltpu.PrefetchScalarGridSpec(
            num_scalar_prefetch=0,
            grid=(nd, nc),
            in_specs=[
                # gx: direction d is lane block d of the fused last dim.
                pl.BlockSpec((chunk_t, Bp, 4 * Hp),
                             lambda d, tc: (chunk_idx(d, tc), 0, d)),
                # bias: tiny, per direction.
                pl.BlockSpec((None, 1, 4 * Hp), lambda d, tc: (d, 0, 0)),
                # W_hh: only changes with the direction axis -> single buffer.
                pl.BlockSpec((None, Hp, 4 * Hp), lambda d, tc: (d, 0, 0),
                             pipeline_mode=pl.Buffered(1)),
            ],
            # Fused output layout (Tp, Bp, nd*Hp): direction d writes lane
            # block d directly; no post-kernel transpose pass.
            out_specs=pl.BlockSpec((chunk_t, Bp, Hp),
                                   lambda d, tc: (chunk_idx(d, tc), 0, d)),
            scratch_shapes=[
                pltpu.VMEM((Bp, Hp), jnp.float32),   # h
                pltpu.VMEM((Bp, Hp), jnp.float32),   # c
            ],
        ),
        compiler_params=pltpu.CompilerParams(
            # Directions are independent -> may split across TensorCores on
            # v7x; time chunks carry the recurrence and stay sequential.
            dimension_semantics=("parallel", "arbitrary"),
            vmem_limit_bytes=vmem_budget + (16 << 20),
        ),
    )(gx_all, b_all, whh_all)

    # Drop time/batch padding; strip per-direction lane padding (free reshape
    # + no-op slice when H is already a multiple of 128).
    out = out[:T, :B]
    out = out.reshape(T, B, nd, Hp)[..., :H].reshape(T, B, nd * H)
    return out


class LstmPallas:
    """Pallas equivalent of the PyTorch `Lstm` module's forward pass."""

    def __init__(self, latent_dim, hidden_size, lstm_layers, bidirectional, key):
        self.latent_dim = latent_dim
        self.hidden_size = hidden_size
        self.lstm_layers = lstm_layers
        self.num_directions = 2 if bidirectional else 1
        # TODO(synk): persistent hidden_state across calls (PyTorch keeps
        # self.hidden_state); every forward here starts from a zero state,
        # matching the first call after reset_hidden_state().
        self.params = []
        stdv = 1.0 / sqrt(hidden_size)
        for layer in range(lstm_layers):
            in_dim = latent_dim if layer == 0 else hidden_size * self.num_directions
            per_dir = []
            for _ in range(self.num_directions):
                key, k1, k2, k3, k4 = jax.random.split(key, 5)
                w_ih = jax.random.uniform(k1, (4 * hidden_size, in_dim), jnp.float32, -stdv, stdv)
                w_hh = jax.random.uniform(k2, (4 * hidden_size, hidden_size), jnp.float32, -stdv, stdv)
                b_ih = jax.random.uniform(k3, (4 * hidden_size,), jnp.float32, -stdv, stdv)
                b_hh = jax.random.uniform(k4, (4 * hidden_size,), jnp.float32, -stdv, stdv)
                per_dir.append((w_ih, w_hh, b_ih, b_hh))
            self.params.append(per_dir)

    def __call__(self, x_btd):
        """x_btd: (B, T, latent_dim) -> (B, T, hidden_size * num_directions)"""
        x = jnp.transpose(x_btd, (1, 0, 2))        # time-major (T, B, D)
        for layer_params in self.params:
            x = lstm_layer(x, layer_params, self.hidden_size)
        return jnp.transpose(x, (1, 0, 2)).astype(jnp.float32)  # batch_first


# ------------------------- pure-JAX reference -------------------------------
def _ref_layer_direction(x_tbd, w_ih, w_hh, b_ih, b_hh):
    H = w_hh.shape[1]

    def step(carry, x_t):
        h, c = carry
        gates = x_t @ w_ih.T + h @ w_hh.T + b_ih + b_hh
        i = jax.nn.sigmoid(gates[:, 0 * H:1 * H])
        f = jax.nn.sigmoid(gates[:, 1 * H:2 * H])
        g = jnp.tanh(gates[:, 2 * H:3 * H])
        o = jax.nn.sigmoid(gates[:, 3 * H:4 * H])
        c = f * c + i * g
        h = o * jnp.tanh(c)
        return (h, c), h

    B = x_tbd.shape[1]
    h0 = jnp.zeros((B, H), jnp.float32)
    (_, _), ys = jax.lax.scan(step, (h0, h0), x_tbd)
    return ys


def _ref_forward(model, x_btd):
    x = jnp.transpose(x_btd.astype(jnp.float32), (1, 0, 2))
    for layer_params in model.params:
        outs = [_ref_layer_direction(x, *layer_params[0])]
        if model.num_directions == 2:
            outs.append(_ref_layer_direction(x[::-1], *layer_params[1])[::-1])
        x = jnp.concatenate(outs, axis=-1)
    return jnp.transpose(x, (1, 0, 2))


if __name__ == "__main__":
    latent_dim, hidden_size, lstm_layers, bidirectional = 32, 32, 2, True
    batch, seq = 2, 8

    key = jax.random.PRNGKey(0)
    key, pkey, xkey = jax.random.split(key, 3)

    model = LstmPallas(latent_dim, hidden_size, lstm_layers, bidirectional, pkey)
    x = jax.random.normal(xkey, (batch, seq, latent_dim), jnp.float32)

    out = jax.block_until_ready(model(x))

    expected_shape = (batch, seq, hidden_size * (2 if bidirectional else 1))
    assert out.shape == expected_shape, (out.shape, expected_shape)

    ref = jax.block_until_ready(_ref_forward(model, x))
    err = float(jnp.max(jnp.abs(out - ref)))
    # bf16 MXU operands, bf16 gx stream and bf16 layer outputs (f32 state /
    # accumulation) introduce ~1e-2-level drift vs the all-f32 reference.
    assert err < 5e-2, err

    print("KERNEL_OK")
</pallas_src>

<mosaic_0001>
module attributes {stable_mosaic.version = 11 : i64} {
  func.func @_lstm_recurrent_kernel(%arg0: i32, %arg1: i32, %arg2: memref<8x8x512xbf16, #tpu.memory_space<vmem>>, %arg3: memref<1x1x512xf32, #tpu.memory_space<vmem>>, %arg4: memref<1x128x512xbf16, #tpu.memory_space<vmem>>, %arg5: memref<8x8x128xbf16, #tpu.memory_space<vmem>>, %arg6: memref<8x128xf32, #tpu.memory_space<vmem>>, %arg7: memref<8x128xf32, #tpu.memory_space<vmem>>) attributes {dimension_semantics = [#tpu.dimension_semantics<parallel>, #tpu.dimension_semantics<arbitrary>], iteration_bounds = array<i64: 2, 1>, scalar_prefetch = 0 : i64, scratch_operands = 2 : i64, tpu.core_type = #tpu.core_type<tc>, window_params = [{transform_indices = @transform_0, window_bounds = array<i64: 8, 8, 512>}, {transform_indices = @transform_1, window_bounds = array<i64: 1, 1, 512>}, {pipeline_mode = #tpu.pipeline_mode<synchronous>, transform_indices = @transform_2, window_bounds = array<i64: 1, 128, 512>}, {transform_indices = @transform_3, window_bounds = array<i64: 8, 8, 128>}]} {
    %c0_i32 = arith.constant 0 : i32
    %0 = arith.cmpi eq, %arg1, %c0_i32 : i32
    %1 = arith.extui %0 : i1 to i32
    %c0_i32_0 = arith.constant 0 : i32
    %2 = arith.cmpi ne, %1, %c0_i32_0 : i32
    scf.if %2 {
      %cst_206 = arith.constant 0.000000e+00 : f32
      %439 = vector.broadcast %cst_206 : f32 to vector<8x128xf32>
      %c0_207 = arith.constant 0 : index
      %c0_208 = arith.constant 0 : index
      %440 = vector.load %arg6[%c0_207, %c0_208] : memref<8x128xf32, #tpu.memory_space<vmem>>, vector<8x128xf32>
      tpu.vector_store %arg6[%c0_207, %c0_208], %439 {strides = array<i32>} : memref<8x128xf32, #tpu.memory_space<vmem>>, vector<8x128xf32>,
      %cst_209 = arith.constant 0.000000e+00 : f32
      %441 = vector.broadcast %cst_209 : f32 to vector<8x128xf32>
      %c0_210 = arith.constant 0 : index
      %c0_211 = arith.constant 0 : index
      %442 = vector.load %arg7[%c0_210, %c0_211] : memref<8x128xf32, #tpu.memory_space<vmem>>, vector<8x128xf32>
      tpu.vector_store %arg7[%c0_210, %c0_211], %441 {strides = array<i32>} : memref<8x128xf32, #tpu.memory_space<vmem>>, vector<8x128xf32>,
    } else {
    }
    %c0 = arith.constant 0 : index
    %c0_1 = arith.constant 0 : index
    %c0_2 = arith.constant 0 : index
    %3 = vector.load %arg4[%c0, %c0_1, %c0_2] : memref<1x128x512xbf16, #tpu.memory_space<vmem>>, vector<1x128x512xbf16>
    %4 = vector.shape_cast %3 : vector<1x128x512xbf16> to vector<128x512xbf16>
    %c0_3 = arith.constant 0 : index
    %c0_4 = arith.constant 0 : index
    %c0_5 = arith.constant 0 : index
    %5 = vector.load %arg3[%c0_3, %c0_4, %c0_5] : memref<1x1x512xf32, #tpu.memory_space<vmem>>, vector<1x1x512xf32>
    %6 = vector.shape_cast %5 : vector<1x1x512xf32> to vector<1x512xf32>
    %c0_i32_6 = arith.constant 0 : i32
    %c7_i32 = arith.constant 7 : i32
    %7 = arith.muli %arg0, %c7_i32 : i32
    %c2_i32 = arith.constant 2 : i32
    %8 = arith.muli %c2_i32, %arg0 : i32
    %c1_i32 = arith.constant 1 : i32
    %9 = arith.subi %c1_i32, %8 : i32
    %10 = arith.muli %9, %c0_i32_6 : i32
    %11 = arith.addi %7, %10 : i32
    %12 = arith.index_cast %11 : i32 to index
    %c0_7 = arith.constant 0 : index
    %c0_8 = arith.constant 0 : index
    %13 = vector.load %arg2[%12, %c0_7, %c0_8] : memref<8x8x512xbf16, #tpu.memory_space<vmem>>, vector<1x8x512xbf16>
    %14 = vector.shape_cast %13 : vector<1x8x512xbf16> to vector<8x512xbf16>
    %15 = arith.extf %14 : vector<8x512xbf16> to vector<8x512xf32>
    %16 = vector.broadcast %6 : vector<1x512xf32> to vector<8x512xf32>
    %17 = arith.addf %15, %16 : vector<8x512xf32>
    %c0_9 = arith.constant 0 : index
    %c0_10 = arith.constant 0 : index
    %18 = vector.load %arg6[%c0_9, %c0_10] : memref<8x128xf32, #tpu.memory_space<vmem>>, vector<8x128xf32>
    %19 = arith.truncf %18 : vector<8x128xf32> to vector<8x128xbf16>
    %cst = arith.constant dense<0.000000e+00> : vector<8x512xf32>
    %20 = tpu.matmul %19, %4, %cst {dimension_numbers = #tpu.dot_dimension_numbers<[1], [0], [0], [1], [0, 0, 1, 1], [], []>} : vector<8x128xbf16>, vector<128x512xbf16>, vector<8x512xf32> -> vector<8x512xf32>
    %21 = arith.addf %17, %20 : vector<8x512xf32>
    %22 = vector.extract_strided_slice %21 {offsets = [0, 0], sizes = [8, 128], strides = [1, 1]} : vector<8x512xf32> to vector<8x128xf32>
    %cst_11 = arith.constant 5.000000e-01 : f32
    %23 = vector.broadcast %cst_11 : f32 to vector<8x128xf32>
    %24 = arith.mulf %23, %22 : vector<8x128xf32>
    %25 = math.tanh %24 : vector<8x128xf32>
    %cst_12 = arith.constant 1.000000e+00 : f32
    %26 = vector.broadcast %cst_12 : f32 to vector<8x128xf32>
    %27 = arith.addf %26, %25 : vector<8x128xf32>
    %cst_13 = arith.constant 5.000000e-01 : f32
    %28 = vector.broadcast %cst_13 : f32 to vector<8x128xf32>
    %29 = arith.mulf %28, %27 : vector<8x128xf32>
    %30 = vector.extract_strided_slice %21 {offsets = [0, 128], sizes = [8, 128], strides = [1, 1]} : vector<8x512xf32> to vector<8x128xf32>
    %cst_14 = arith.constant 5.000000e-01 : f32
    %31 = vector.broadcast %cst_14 : f32 to vector<8x128xf32>
    %32 = arith.mulf %31, %30 : vector<8x128xf32>
    %33 = math.tanh %32 : vector<8x128xf32>
    %cst_15 = arith.constant 1.000000e+00 : f32
    %34 = vector.broadcast %cst_15 : f32 to vector<8x128xf32>
    %35 = arith.addf %34, %33 : vector<8x128xf32>
    %cst_16 = arith.constant 5.000000e-01 : f32
    %36 = vector.broadcast %cst_16 : f32 to vector<8x128xf32>
    %37 = arith.mulf %36, %35 : vector<8x128xf32>
    %38 = vector.extract_strided_slice %21 {offsets = [0, 256], sizes = [8, 128], strides = [1, 1]} : vector<8x512xf32> to vector<8x128xf32>
    %39 = math.tanh %38 : vector<8x128xf32>
    %40 = vector.extract_strided_slice %21 {offsets = [0, 384], sizes = [8, 128], strides = [1, 1]} : vector<8x512xf32> to vector<8x128xf32>
    %cst_17 = arith.constant 5.000000e-01 : f32
    %41 = vector.broadcast %cst_17 : f32 to vector<8x128xf32>
    %42 = arith.mulf %41, %40 : vector<8x128xf32>
    %43 = math.tanh %42 : vector<8x128xf32>
    %cst_18 = arith.constant 1.000000e+00 : f32
    %44 = vector.broadcast %cst_18 : f32 to vector<8x128xf32>
    %45 = arith.addf %44, %43 : vector<8x128xf32>
    %cst_19 = arith.constant 5.000000e-01 : f32
    %46 = vector.broadcast %cst_19 : f32 to vector<8x128xf32>
    %47 = arith.mulf %46, %45 : vector<8x128xf32>
    %c0_20 = arith.constant 0 : index
    %c0_21 = arith.constant 0 : index
    %48 = vector.load %arg7[%c0_20, %c0_21] : memref<8x128xf32, #tpu.memory_space<vmem>>, vector<8x128xf32>
    %49 = arith.mulf %37, %48 : vector<8x128xf32>
    %50 = arith.mulf %29, %39 : vector<8x128xf32>
    %51 = arith.addf %49, %50 : vector<8x128xf32>
    %52 = math.tanh %51 : vector<8x128xf32>
    %53 = arith.mulf %47, %52 : vector<8x128xf32>
    %c0_22 = arith.constant 0 : index
    %c0_23 = arith.constant 0 : index
    %54 = vector.load %arg7[%c0_22, %c0_23] : memref<8x128xf32, #tpu.memory_space<vmem>>, vector<8x128xf32>
    tpu.vector_store %arg7[%c0_22, %c0_23], %51 {strides = array<i32>} : memref<8x128xf32, #tpu.memory_space<vmem>>, vector<8x128xf32>,
    %c0_24 = arith.constant 0 : index
    %c0_25 = arith.constant 0 : index
    %55 = vector.load %arg6[%c0_24, %c0_25] : memref<8x128xf32, #tpu.memory_space<vmem>>, vector<8x128xf32>
    tpu.vector_store %arg6[%c0_24, %c0_25], %53 {strides = array<i32>} : memref<8x128xf32, #tpu.memory_space<vmem>>, vector<8x128xf32>,
    %56 = arith.truncf %53 : vector<8x128xf32> to vector<8x128xbf16>
    %57 = arith.index_cast %11 : i32 to index
    %c0_26 = arith.constant 0 : index
    %c0_27 = arith.constant 0 : index
    %58 = vector.load %arg5[%57, %c0_26, %c0_27] : memref<8x8x128xbf16, #tpu.memory_space<vmem>>, vector<1x8x128xbf16>
    %59 = vector.shape_cast %58 : vector<1x8x128xbf16> to vector<8x128xbf16>
    %60 = vector.shape_cast %56 : vector<8x128xbf16> to vector<1x8x128xbf16>
    tpu.vector_store %arg5[%57, %c0_26, %c0_27], %60 {strides = array<i32>} : memref<8x8x128xbf16, #tpu.memory_space<vmem>>, vector<1x8x128xbf16>,
    %c1_i32_28 = arith.constant 1 : i32
    %c7_i32_29 = arith.constant 7 : i32
    %61 = arith.muli %arg0, %c7_i32_29 : i32
    %c2_i32_30 = arith.constant 2 : i32
    %62 = arith.muli %c2_i32_30, %arg0 : i32
    %c1_i32_31 = arith.constant 1 : i32
    %63 = arith.subi %c1_i32_31, %62 : i32
    %64 = arith.muli %63, %c1_i32_28 : i32
    %65 = arith.addi %61, %64 : i32
    %66 = arith.index_cast %65 : i32 to index
    %c0_32 = arith.constant 0 : index
    %c0_33 = arith.constant 0 : index
    %67 = vector.load %arg2[%66, %c0_32, %c0_33] : memref<8x8x512xbf16, #tpu.memory_space<vmem>>, vector<1x8x512xbf16>
    %68 = vector.shape_cast %67 : vector<1x8x512xbf16> to vector<8x512xbf16>
    %69 = arith.extf %68 : vector<8x512xbf16> to vector<8x512xf32>
    %70 = vector.broadcast %6 : vector<1x512xf32> to vector<8x512xf32>
    %71 = arith.addf %69, %70 : vector<8x512xf32>
    %c0_34 = arith.constant 0 : index
    %c0_35 = arith.constant 0 : index
    %72 = vector.load %arg6[%c0_34, %c0_35] : memref<8x128xf32, #tpu.memory_space<vmem>>, vector<8x128xf32>
    %73 = arith.truncf %72 : vector<8x128xf32> to vector<8x128xbf16>
    %cst_36 = arith.constant dense<0.000000e+00> : vector<8x512xf32>
    %74 = tpu.matmul %73, %4, %cst_36 {dimension_numbers = #tpu.dot_dimension_numbers<[1], [0], [0], [1], [0, 0, 1, 1], [], []>} : vector<8x128xbf16>, vector<128x512xbf16>, vector<8x512xf32> -> vector<8x512xf32>
    %75 = arith.addf %71, %74 : vector<8x512xf32>
    %76 = vector.extract_strided_slice %75 {offsets = [0, 0], sizes = [8, 128], strides = [1, 1]} : vector<8x512xf32> to vector<8x128xf32>
    %cst_37 = arith.constant 5.000000e-01 : f32
    %77 = vector.broadcast %cst_37 : f32 to vector<8x128xf32>
    %78 = arith.mulf %77, %76 : vector<8x128xf32>
    %79 = math.tanh %78 : vector<8x128xf32>
    %cst_38 = arith.constant 1.000000e+00 : f32
    %80 = vector.broadcast %cst_38 : f32 to vector<8x128xf32>
    %81 = arith.addf %80, %79 : vector<8x128xf32>
    %cst_39 = arith.constant 5.000000e-01 : f32
    %82 = vector.broadcast %cst_39 : f32 to vector<8x128xf32>
    %83 = arith.mulf %82, %81 : vector<8x128xf32>
    %84 = vector.extract_strided_slice %75 {offsets = [0, 128], sizes = [8, 128], strides = [1, 1]} : vector<8x512xf32> to vector<8x128xf32>
    %cst_40 = arith.constant 5.000000e-01 : f32
    %85 = vector.broadcast %cst_40 : f32 to vector<8x128xf32>
    %86 = arith.mulf %85, %84 : vector<8x128xf32>
    %87 = math.tanh %86 : vector<8x128xf32>
    %cst_41 = arith.constant 1.000000e+00 : f32
    %88 = vector.broadcast %cst_41 : f32 to vector<8x128xf32>
    %89 = arith.addf %88, %87 : vector<8x128xf32>
    %cst_42 = arith.constant 5.000000e-01 : f32
    %90 = vector.broadcast %cst_42 : f32 to vector<8x128xf32>
    %91 = arith.mulf %90, %89 : vector<8x128xf32>
    %92 = vector.extract_strided_slice %75 {offsets = [0, 256], sizes = [8, 128], strides = [1, 1]} : vector<8x512xf32> to vector<8x128xf32>
    %93 = math.tanh %92 : vector<8x128xf32>
    %94 = vector.extract_strided_slice %75 {offsets = [0, 384], sizes = [8, 128], strides = [1, 1]} : vector<8x512xf32> to vector<8x128xf32>
    %cst_43 = arith.constant 5.000000e-01 : f32
    %95 = vector.broadcast %cst_43 : f32 to vector<8x128xf32>
    %96 = arith.mulf %95, %94 : vector<8x128xf32>
    %97 = math.tanh %96 : vector<8x128xf32>
    %cst_44 = arith.constant 1.000000e+00 : f32
    %98 = vector.broadcast %cst_44 : f32 to vector<8x128xf32>
    %99 = arith.addf %98, %97 : vector<8x128xf32>
    %cst_45 = arith.constant 5.000000e-01 : f32
    %100 = vector.broadcast %cst_45 : f32 to vector<8x128xf32>
    %101 = arith.mulf %100, %99 : vector<8x128xf32>
    %c0_46 = arith.constant 0 : index
    %c0_47 = arith.constant 0 : index
    %102 = vector.load %arg7[%c0_46, %c0_47] : memref<8x128xf32, #tpu.memory_space<vmem>>, vector<8x128xf32>
    %103 = arith.mulf %91, %102 : vector<8x128xf32>
    %104 = arith.mulf %83, %93 : vector<8x128xf32>
    %105 = arith.addf %103, %104 : vector<8x128xf32>
    %106 = math.tanh %105 : vector<8x128xf32>
    %107 = arith.mulf %101, %106 : vector<8x128xf32>
    %c0_48 = arith.constant 0 : index
    %c0_49 = arith.constant 0 : index
    %108 = vector.load %arg7[%c0_48, %c0_49] : memref<8x128xf32, #tpu.memory_space<vmem>>, vector<8x128xf32>
    tpu.vector_store %arg7[%c0_48, %c0_49], %105 {strides = array<i32>} : memref<8x128xf32, #tpu.memory_space<vmem>>, vector<8x128xf32>,
    %c0_50 = arith.constant 0 : index
    %c0_51 = arith.constant 0 : index
    %109 = vector.load %arg6[%c0_50, %c0_51] : memref<8x128xf32, #tpu.memory_space<vmem>>, vector<8x128xf32>
    tpu.vector_store %arg6[%c0_50, %c0_51], %107 {strides = array<i32>} : memref<8x128xf32, #tpu.memory_space<vmem>>, vector<8x128xf32>,
    %110 = arith.truncf %107 : vector<8x128xf32> to vector<8x128xbf16>
    %111 = arith.index_cast %65 : i32 to index
    %c0_52 = arith.constant 0 : index
    %c0_53 = arith.constant 0 : index
    %112 = vector.load %arg5[%111, %c0_52, %c0_53] : memref<8x8x128xbf16, #tpu.memory_space<vmem>>, vector<1x8x128xbf16>
    %113 = vector.shape_cast %112 : vector<1x8x128xbf16> to vector<8x128xbf16>
    %114 = vector.shape_cast %110 : vector<8x128xbf16> to vector<1x8x128xbf16>
    tpu.vector_store %arg5[%111, %c0_52, %c0_53], %114 {strides = array<i32>} : memref<8x8x128xbf16, #tpu.memory_space<vmem>>, vector<1x8x128xbf16>,
    %c2_i32_54 = arith.constant 2 : i32
    %c7_i32_55 = arith.constant 7 : i32
    %115 = arith.muli %arg0, %c7_i32_55 : i32
    %c2_i32_56 = arith.constant 2 : i32
    %116 = arith.muli %c2_i32_56, %arg0 : i32
    %c1_i32_57 = arith.constant 1 : i32
    %117 = arith.subi %c1_i32_57, %116 : i32
    %118 = arith.muli %117, %c2_i32_54 : i32
    %119 = arith.addi %115, %118 : i32
    %120 = arith.index_cast %119 : i32 to index
    %c0_58 = arith.constant 0 : index
    %c0_59 = arith.constant 0 : index
    %121 = vector.load %arg2[%120, %c0_58, %c0_59] : memref<8x8x512xbf16, #tpu.memory_space<vmem>>, vector<1x8x512xbf16>
    %122 = vector.shape_cast %121 : vector<1x8x512xbf16> to vector<8x512xbf16>
    %123 = arith.extf %122 : vector<8x512xbf16> to vector<8x512xf32>
    %124 = vector.broadcast %6 : vector<1x512xf32> to vector<8x512xf32>
    %125 = arith.addf %123, %124 : vector<8x512xf32>
    %c0_60 = arith.constant 0 : index
    %c0_61 = arith.constant 0 : index
    %126 = vector.load %arg6[%c0_60, %c0_61] : memref<8x128xf32, #tpu.memory_space<vmem>>, vector<8x128xf32>
    %127 = arith.truncf %126 : vector<8x128xf32> to vector<8x128xbf16>
    %cst_62 = arith.constant dense<0.000000e+00> : vector<8x512xf32>
    %128 = tpu.matmul %127, %4, %cst_62 {dimension_numbers = #tpu.dot_dimension_numbers<[1], [0], [0], [1], [0, 0, 1, 1], [], []>} : vector<8x128xbf16>, vector<128x512xbf16>, vector<8x512xf32> -> vector<8x512xf32>
    %129 = arith.addf %125, %128 : vector<8x512xf32>
    %130 = vector.extract_strided_slice %129 {offsets = [0, 0], sizes = [8, 128], strides = [1, 1]} : vector<8x512xf32> to vector<8x128xf32>
    %cst_63 = arith.constant 5.000000e-01 : f32
    %131 = vector.broadcast %cst_63 : f32 to vector<8x128xf32>
    %132 = arith.mulf %131, %130 : vector<8x128xf32>
    %133 = math.tanh %132 : vector<8x128xf32>
    %cst_64 = arith.constant 1.000000e+00 : f32
    %134 = vector.broadcast %cst_64 : f32 to vector<8x128xf32>
    %135 = arith.addf %134, %133 : vector<8x128xf32>
    %cst_65 = arith.constant 5.000000e-01 : f32
    %136 = vector.broadcast %cst_65 : f32 to vector<8x128xf32>
    %137 = arith.mulf %136, %135 : vector<8x128xf32>
    %138 = vector.extract_strided_slice %129 {offsets = [0, 128], sizes = [8, 128], strides = [1, 1]} : vector<8x512xf32> to vector<8x128xf32>
    %cst_66 = arith.constant 5.000000e-01 : f32
    %139 = vector.broadcast %cst_66 : f32 to vector<8x128xf32>
    %140 = arith.mulf %139, %138 : vector<8x128xf32>
    %141 = math.tanh %140 : vector<8x128xf32>
    %cst_67 = arith.constant 1.000000e+00 : f32
    %142 = vector.broadcast %cst_67 : f32 to vector<8x128xf32>
    %143 = arith.addf %142, %141 : vector<8x128xf32>
    %cst_68 = arith.constant 5.000000e-01 : f32
    %144 = vector.broadcast %cst_68 : f32 to vector<8x128xf32>
    %145 = arith.mulf %144, %143 : vector<8x128xf32>
    %146 = vector.extract_strided_slice %129 {offsets = [0, 256], sizes = [8, 128], strides = [1, 1]} : vector<8x512xf32> to vector<8x128xf32>
    %147 = math.tanh %146 : vector<8x128xf32>
    %148 = vector.extract_strided_slice %129 {offsets = [0, 384], sizes = [8, 128], strides = [1, 1]} : vector<8x512xf32> to vector<8x128xf32>
    %cst_69 = arith.constant 5.000000e-01 : f32
    %149 = vector.broadcast %cst_69 : f32 to vector<8x128xf32>
    %150 = arith.mulf %149, %148 : vector<8x128xf32>
    %151 = math.tanh %150 : vector<8x128xf32>
    %cst_70 = arith.constant 1.000000e+00 : f32
    %152 = vector.broadcast %cst_70 : f32 to vector<8x128xf32>
    %153 = arith.addf %152, %151 : vector<8x128xf32>
    %cst_71 = arith.constant 5.000000e-01 : f32
    %154 = vector.broadcast %cst_71 : f32 to vector<8x128xf32>
    %155 = arith.mulf %154, %153 : vector<8x128xf32>
    %c0_72 = arith.constant 0 : index
    %c0_73 = arith.constant 0 : index
    %156 = vector.load %arg7[%c0_72, %c0_73] : memref<8x128xf32, #tpu.memory_space<vmem>>, vector<8x128xf32>
    %157 = arith.mulf %145, %156 : vector<8x128xf32>
    %158 = arith.mulf %137, %147 : vector<8x128xf32>
    %159 = arith.addf %157, %158 : vector<8x128xf32>
    %160 = math.tanh %159 : vector<8x128xf32>
    %161 = arith.mulf %155, %160 : vector<8x128xf32>
    %c0_74 = arith.constant 0 : index
    %c0_75 = arith.constant 0 : index
    %162 = vector.load %arg7[%c0_74, %c0_75] : memref<8x128xf32, #tpu.memory_space<vmem>>, vector<8x128xf32>
    tpu.vector_store %arg7[%c0_74, %c0_75], %159 {strides = array<i32>} : memref<8x128xf32, #tpu.memory_space<vmem>>, vector<8x128xf32>,
    %c0_76 = arith.constant 0 : index
    %c0_77 = arith.constant 0 : index
    %163 = vector.load %arg6[%c0_76, %c0_77] : memref<8x128xf32, #tpu.memory_space<vmem>>, vector<8x128xf32>
    tpu.vector_store %arg6[%c0_76, %c0_77], %161 {strides = array<i32>} : memref<8x128xf32, #tpu.memory_space<vmem>>, vector<8x128xf32>,
    %164 = arith.truncf %161 : vector<8x128xf32> to vector<8x128xbf16>
    %165 = arith.index_cast %119 : i32 to index
    %c0_78 = arith.constant 0 : index
    %c0_79 = arith.constant 0 : index
    %166 = vector.load %arg5[%165, %c0_78, %c0_79] : memref<8x8x128xbf16, #tpu.memory_space<vmem>>, vector<1x8x128xbf16>
    %167 = vector.shape_cast %166 : vector<1x8x128xbf16> to vector<8x128xbf16>
    %168 = vector.shape_cast %164 : vector<8x128xbf16> to vector<1x8x128xbf16>
    tpu.vector_store %arg5[%165, %c0_78, %c0_79], %168 {strides = array<i32>} : memref<8x8x128xbf16, #tpu.memory_space<vmem>>, vector<1x8x128xbf16>,
    %c3_i32 = arith.constant 3 : i32
    %c7_i32_80 = arith.constant 7 : i32
    %169 = arith.muli %arg0, %c7_i32_80 : i32
    %c2_i32_81 = arith.constant 2 : i32
    %170 = arith.muli %c2_i32_81, %arg0 : i32
    %c1_i32_82 = arith.constant 1 : i32
    %171 = arith.subi %c1_i32_82, %170 : i32
    %172 = arith.muli %171, %c3_i32 : i32
    %173 = arith.addi %169, %172 : i32
    %174 = arith.index_cast %173 : i32 to index
    %c0_83 = arith.constant 0 : index
    %c0_84 = arith.constant 0 : index
    %175 = vector.load %arg2[%174, %c0_83, %c0_84] : memref<8x8x512xbf16, #tpu.memory_space<vmem>>, vector<1x8x512xbf16>
    %176 = vector.shape_cast %175 : vector<1x8x512xbf16> to vector<8x512xbf16>
    %177 = arith.extf %176 : vector<8x512xbf16> to vector<8x512xf32>
    %178 = vector.broadcast %6 : vector<1x512xf32> to vector<8x512xf32>
    %179 = arith.addf %177, %178 : vector<8x512xf32>
    %c0_85 = arith.constant 0 : index
    %c0_86 = arith.constant 0 : index
    %180 = vector.load %arg6[%c0_85, %c0_86] : memref<8x128xf32, #tpu.memory_space<vmem>>, vector<8x128xf32>
    %181 = arith.truncf %180 : vector<8x128xf32> to vector<8x128xbf16>
    %cst_87 = arith.constant dense<0.000000e+00> : vector<8x512xf32>
    %182 = tpu.matmul %181, %4, %cst_87 {dimension_numbers = #tpu.dot_dimension_numbers<[1], [0], [0], [1], [0, 0, 1, 1], [], []>} : vector<8x128xbf16>, vector<128x512xbf16>, vector<8x512xf32> -> vector<8x512xf32>
    %183 = arith.addf %179, %182 : vector<8x512xf32>
    %184 = vector.extract_strided_slice %183 {offsets = [0, 0], sizes = [8, 128], strides = [1, 1]} : vector<8x512xf32> to vector<8x128xf32>
    %cst_88 = arith.constant 5.000000e-01 : f32
    %185 = vector.broadcast %cst_88 : f32 to vector<8x128xf32>
    %186 = arith.mulf %185, %184 : vector<8x128xf32>
    %187 = math.tanh %186 : vector<8x128xf32>
    %cst_89 = arith.constant 1.000000e+00 : f32
    %188 = vector.broadcast %cst_89 : f32 to vector<8x128xf32>
    %189 = arith.addf %188, %187 : vector<8x128xf32>
    %cst_90 = arith.constant 5.000000e-01 : f32
    %190 = vector.broadcast %cst_90 : f32 to vector<8x128xf32>
    %191 = arith.mulf %190, %189 : vector<8x128xf32>
    %192 = vector.extract_strided_slice %183 {offsets = [0, 128], sizes = [8, 128], strides = [1, 1]} : vector<8x512xf32> to vector<8x128xf32>
    %cst_91 = arith.constant 5.000000e-01 : f32
    %193 = vector.broadcast %cst_91 : f32 to vector<8x128xf32>
    %194 = arith.mulf %193, %192 : vector<8x128xf32>
    %195 = math.tanh %194 : vector<8x128xf32>
    %cst_92 = arith.constant 1.000000e+00 : f32
    %196 = vector.broadcast %cst_92 : f32 to vector<8x128xf32>
    %197 = arith.addf %196, %195 : vector<8x128xf32>
    %cst_93 = arith.constant 5.000000e-01 : f32
    %198 = vector.broadcast %cst_93 : f32 to vector<8x128xf32>
    %199 = arith.mulf %198, %197 : vector<8x128xf32>
    %200 = vector.extract_strided_slice %183 {offsets = [0, 256], sizes = [8, 128], strides = [1, 1]} : vector<8x512xf32> to vector<8x128xf32>
    %201 = math.tanh %200 : vector<8x128xf32>
    %202 = vector.extract_strided_slice %183 {offsets = [0, 384], sizes = [8, 128], strides = [1, 1]} : vector<8x512xf32> to vector<8x128xf32>
    %cst_94 = arith.constant 5.000000e-01 : f32
    %203 = vector.broadcast %cst_94 : f32 to vector<8x128xf32>
    %204 = arith.mulf %203, %202 : vector<8x128xf32>
    %205 = math.tanh %204 : vector<8x128xf32>
    %cst_95 = arith.constant 1.000000e+00 : f32
    %206 = vector.broadcast %cst_95 : f32 to vector<8x128xf32>
    %207 = arith.addf %206, %205 : vector<8x128xf32>
    %cst_96 = arith.constant 5.000000e-01 : f32
    %208 = vector.broadcast %cst_96 : f32 to vector<8x128xf32>
    %209 = arith.mulf %208, %207 : vector<8x128xf32>
    %c0_97 = arith.constant 0 : index
    %c0_98 = arith.constant 0 : index
    %210 = vector.load %arg7[%c0_97, %c0_98] : memref<8x128xf32, #tpu.memory_space<vmem>>, vector<8x128xf32>
    %211 = arith.mulf %199, %210 : vector<8x128xf32>
    %212 = arith.mulf %191, %201 : vector<8x128xf32>
    %213 = arith.addf %211, %212 : vector<8x128xf32>
    %214 = math.tanh %213 : vector<8x128xf32>
    %215 = arith.mulf %209, %214 : vector<8x128xf32>
    %c0_99 = arith.constant 0 : index
    %c0_100 = arith.constant 0 : index
    %216 = vector.load %arg7[%c0_99, %c0_100] : memref<8x128xf32, #tpu.memory_space<vmem>>, vector<8x128xf32>
    tpu.vector_store %arg7[%c0_99, %c0_100], %213 {strides = array<i32>} : memref<8x128xf32, #tpu.memory_space<vmem>>, vector<8x128xf32>,
    %c0_101 = arith.constant 0 : index
    %c0_102 = arith.constant 0 : index
    %217 = vector.load %arg6[%c0_101, %c0_102] : memref<8x128xf32, #tpu.memory_space<vmem>>, vector<8x128xf32>
    tpu.vector_store %arg6[%c0_101, %c0_102], %215 {strides = array<i32>} : memref<8x128xf32, #tpu.memory_space<vmem>>, vector<8x128xf32>,
    %218 = arith.truncf %215 : vector<8x128xf32> to vector<8x128xbf16>
    %219 = arith.index_cast %173 : i32 to index
    %c0_103 = arith.constant 0 : index
    %c0_104 = arith.constant 0 : index
    %220 = vector.load %arg5[%219, %c0_103, %c0_104] : memref<8x8x128xbf16, #tpu.memory_space<vmem>>, vector<1x8x128xbf16>
    %221 = vector.shape_cast %220 : vector<1x8x128xbf16> to vector<8x128xbf16>
    %222 = vector.shape_cast %218 : vector<8x128xbf16> to vector<1x8x128xbf16>
    tpu.vector_store %arg5[%219, %c0_103, %c0_104], %222 {strides = array<i32>} : memref<8x8x128xbf16, #tpu.memory_space<vmem>>, vector<1x8x128xbf16>,
    %c4_i32 = arith.constant 4 : i32
    %c7_i32_105 = arith.constant 7 : i32
    %223 = arith.muli %arg0, %c7_i32_105 : i32
    %c2_i32_106 = arith.constant 2 : i32
    %224 = arith.muli %c2_i32_106, %arg0 : i32
    %c1_i32_107 = arith.constant 1 : i32
    %225 = arith.subi %c1_i32_107, %224 : i32
    %226 = arith.muli %225, %c4_i32 : i32
    %227 = arith.addi %223, %226 : i32
    %228 = arith.index_cast %227 : i32 to index
    %c0_108 = arith.constant 0 : index
    %c0_109 = arith.constant 0 : index
    %229 = vector.load %arg2[%228, %c0_108, %c0_109] : memref<8x8x512xbf16, #tpu.memory_space<vmem>>, vector<1x8x512xbf16>
    %230 = vector.shape_cast %229 : vector<1x8x512xbf16> to vector<8x512xbf16>
    %231 = arith.extf %230 : vector<8x512xbf16> to vector<8x512xf32>
    %232 = vector.broadcast %6 : vector<1x512xf32> to vector<8x512xf32>
    %233 = arith.addf %231, %232 : vector<8x512xf32>
    %c0_110 = arith.constant 0 : index
    %c0_111 = arith.constant 0 : index
    %234 = vector.load %arg6[%c0_110, %c0_111] : memref<8x128xf32, #tpu.memory_space<vmem>>, vector<8x128xf32>
    %235 = arith.truncf %234 : vector<8x128xf32> to vector<8x128xbf16>
    %cst_112 = arith.constant dense<0.000000e+00> : vector<8x512xf32>
    %236 = tpu.matmul %235, %4, %cst_112 {dimension_numbers = #tpu.dot_dimension_numbers<[1], [0], [0], [1], [0, 0, 1, 1], [], []>} : vector<8x128xbf16>, vector<128x512xbf16>, vector<8x512xf32> -> vector<8x512xf32>
    %237 = arith.addf %233, %236 : vector<8x512xf32>
    %238 = vector.extract_strided_slice %237 {offsets = [0, 0], sizes = [8, 128], strides = [1, 1]} : vector<8x512xf32> to vector<8x128xf32>
    %cst_113 = arith.constant 5.000000e-01 : f32
    %239 = vector.broadcast %cst_113 : f32 to vector<8x128xf32>
    %240 = arith.mulf %239, %238 : vector<8x128xf32>
    %241 = math.tanh %240 : vector<8x128xf32>
    %cst_114 = arith.constant 1.000000e+00 : f32
    %242 = vector.broadcast %cst_114 : f32 to vector<8x128xf32>
    %243 = arith.addf %242, %241 : vector<8x128xf32>
    %cst_115 = arith.constant 5.000000e-01 : f32
    %244 = vector.broadcast %cst_115 : f32 to vector<8x128xf32>
    %245 = arith.mulf %244, %243 : vector<8x128xf32>
    %246 = vector.extract_strided_slice %237 {offsets = [0, 128], sizes = [8, 128], strides = [1, 1]} : vector<8x512xf32> to vector<8x128xf32>
    %cst_116 = arith.constant 5.000000e-01 : f32
    %247 = vector.broadcast %cst_116 : f32 to vector<8x128xf32>
    %248 = arith.mulf %247, %246 : vector<8x128xf32>
    %249 = math.tanh %248 : vector<8x128xf32>
    %cst_117 = arith.constant 1.000000e+00 : f32
    %250 = vector.broadcast %cst_117 : f32 to vector<8x128xf32>
    %251 = arith.addf %250, %249 : vector<8x128xf32>
    %cst_118 = arith.constant 5.000000e-01 : f32
    %252 = vector.broadcast %cst_118 : f32 to vector<8x128xf32>
    %253 = arith.mulf %252, %251 : vector<8x128xf32>
    %254 = vector.extract_strided_slice %237 {offsets = [0, 256], sizes = [8, 128], strides = [1, 1]} : vector<8x512xf32> to vector<8x128xf32>
    %255 = math.tanh %254 : vector<8x128xf32>
    %256 = vector.extract_strided_slice %237 {offsets = [0, 384], sizes = [8, 128], strides = [1, 1]} : vector<8x512xf32> to vector<8x128xf32>
    %cst_119 = arith.constant 5.000000e-01 : f32
    %257 = vector.broadcast %cst_119 : f32 to vector<8x128xf32>
    %258 = arith.mulf %257, %256 : vector<8x128xf32>
    %259 = math.tanh %258 : vector<8x128xf32>
    %cst_120 = arith.constant 1.000000e+00 : f32
    %260 = vector.broadcast %cst_120 : f32 to vector<8x128xf32>
    %261 = arith.addf %260, %259 : vector<8x128xf32>
    %cst_121 = arith.constant 5.000000e-01 : f32
    %262 = vector.broadcast %cst_121 : f32 to vector<8x128xf32>
    %263 = arith.mulf %262, %261 : vector<8x128xf32>
    %c0_122 = arith.constant 0 : index
    %c0_123 = arith.constant 0 : index
    %264 = vector.load %arg7[%c0_122, %c0_123] : memref<8x128xf32, #tpu.memory_space<vmem>>, vector<8x128xf32>
    %265 = arith.mulf %253, %264 : vector<8x128xf32>
    %266 = arith.mulf %245, %255 : vector<8x128xf32>
    %267 = arith.addf %265, %266 : vector<8x128xf32>
    %268 = math.tanh %267 : vector<8x128xf32>
    %269 = arith.mulf %263, %268 : vector<8x128xf32>
    %c0_124 = arith.constant 0 : index
    %c0_125 = arith.constant 0 : index
    %270 = vector.load %arg7[%c0_124, %c0_125] : memref<8x128xf32, #tpu.memory_space<vmem>>, vector<8x128xf32>
    tpu.vector_store %arg7[%c0_124, %c0_125], %267 {strides = array<i32>} : memref<8x128xf32, #tpu.memory_space<vmem>>, vector<8x128xf32>,
    %c0_126 = arith.constant 0 : index
    %c0_127 = arith.constant 0 : index
    %271 = vector.load %arg6[%c0_126, %c0_127] : memref<8x128xf32, #tpu.memory_space<vmem>>, vector<8x128xf32>
    tpu.vector_store %arg6[%c0_126, %c0_127], %269 {strides = array<i32>} : memref<8x128xf32, #tpu.memory_space<vmem>>, vector<8x128xf32>,
    %272 = arith.truncf %269 : vector<8x128xf32> to vector<8x128xbf16>
    %273 = arith.index_cast %227 : i32 to index
    %c0_128 = arith.constant 0 : index
    %c0_129 = arith.constant 0 : index
    %274 = vector.load %arg5[%273, %c0_128, %c0_129] : memref<8x8x128xbf16, #tpu.memory_space<vmem>>, vector<1x8x128xbf16>
    %275 = vector.shape_cast %274 : vector<1x8x128xbf16> to vector<8x128xbf16>
    %276 = vector.shape_cast %272 : vector<8x128xbf16> to vector<1x8x128xbf16>
    tpu.vector_store %arg5[%273, %c0_128, %c0_129], %276 {strides = array<i32>} : memref<8x8x128xbf16, #tpu.memory_space<vmem>>, vector<1x8x128xbf16>,
    %c5_i32 = arith.constant 5 : i32
    %c7_i32_130 = arith.constant 7 : i32
    %277 = arith.muli %arg0, %c7_i32_130 : i32
    %c2_i32_131 = arith.constant 2 : i32
    %278 = arith.muli %c2_i32_131, %arg0 : i32
    %c1_i32_132 = arith.constant 1 : i32
    %279 = arith.subi %c1_i32_132, %278 : i32
    %280 = arith.muli %279, %c5_i32 : i32
    %281 = arith.addi %277, %280 : i32
    %282 = arith.index_cast %281 : i32 to index
    %c0_133 = arith.constant 0 : index
    %c0_134 = arith.constant 0 : index
    %283 = vector.load %arg2[%282, %c0_133, %c0_134] : memref<8x8x512xbf16, #tpu.memory_space<vmem>>, vector<1x8x512xbf16>
    %284 = vector.shape_cast %283 : vector<1x8x512xbf16> to vector<8x512xbf16>
    %285 = arith.extf %284 : vector<8x512xbf16> to vector<8x512xf32>
    %286 = vector.broadcast %6 : vector<1x512xf32> to vector<8x512xf32>
    %287 = arith.addf %285, %286 : vector<8x512xf32>
    %c0_135 = arith.constant 0 : index
    %c0_136 = arith.constant 0 : index
    %288 = vector.load %arg6[%c0_135, %c0_136] : memref<8x128xf32, #tpu.memory_space<vmem>>, vector<8x128xf32>
    %289 = arith.truncf %288 : vector<8x128xf32> to vector<8x128xbf16>
    %cst_137 = arith.constant dense<0.000000e+00> : vector<8x512xf32>
    %290 = tpu.matmul %289, %4, %cst_137 {dimension_numbers = #tpu.dot_dimension_numbers<[1], [0], [0], [1], [0, 0, 1, 1], [], []>} : vector<8x128xbf16>, vector<128x512xbf16>, vector<8x512xf32> -> vector<8x512xf32>
    %291 = arith.addf %287, %290 : vector<8x512xf32>
    %292 = vector.extract_strided_slice %291 {offsets = [0, 0], sizes = [8, 128], strides = [1, 1]} : vector<8x512xf32> to vector<8x128xf32>
    %cst_138 = arith.constant 5.000000e-01 : f32
    %293 = vector.broadcast %cst_138 : f32 to vector<8x128xf32>
    %294 = arith.mulf %293, %292 : vector<8x128xf32>
    %295 = math.tanh %294 : vector<8x128xf32>
    %cst_139 = arith.constant 1.000000e+00 : f32
    %296 = vector.broadcast %cst_139 : f32 to vector<8x128xf32>
    %297 = arith.addf %296, %295 : vector<8x128xf32>
    %cst_140 = arith.constant 5.000000e-01 : f32
    %298 = vector.broadcast %cst_140 : f32 to vector<8x128xf32>
    %299 = arith.mulf %298, %297 : vector<8x128xf32>
    %300 = vector.extract_strided_slice %291 {offsets = [0, 128], sizes = [8, 128], strides = [1, 1]} : vector<8x512xf32> to vector<8x128xf32>
    %cst_141 = arith.constant 5.000000e-01 : f32
    %301 = vector.broadcast %cst_141 : f32 to vector<8x128xf32>
    %302 = arith.mulf %301, %300 : vector<8x128xf32>
    %303 = math.tanh %302 : vector<8x128xf32>
    %cst_142 = arith.constant 1.000000e+00 : f32
    %304 = vector.broadcast %cst_142 : f32 to vector<8x128xf32>
    %305 = arith.addf %304, %303 : vector<8x128xf32>
    %cst_143 = arith.constant 5.000000e-01 : f32
    %306 = vector.broadcast %cst_143 : f32 to vector<8x128xf32>
    %307 = arith.mulf %306, %305 : vector<8x128xf32>
    %308 = vector.extract_strided_slice %291 {offsets = [0, 256], sizes = [8, 128], strides = [1, 1]} : vector<8x512xf32> to vector<8x128xf32>
    %309 = math.tanh %308 : vector<8x128xf32>
    %310 = vector.extract_strided_slice %291 {offsets = [0, 384], sizes = [8, 128], strides = [1, 1]} : vector<8x512xf32> to vector<8x128xf32>
    %cst_144 = arith.constant 5.000000e-01 : f32
    %311 = vector.broadcast %cst_144 : f32 to vector<8x128xf32>
    %312 = arith.mulf %311, %310 : vector<8x128xf32>
    %313 = math.tanh %312 : vector<8x128xf32>
    %cst_145 = arith.constant 1.000000e+00 : f32
    %314 = vector.broadcast %cst_145 : f32 to vector<8x128xf32>
    %315 = arith.addf %314, %313 : vector<8x128xf32>
    %cst_146 = arith.constant 5.000000e-01 : f32
    %316 = vector.broadcast %cst_146 : f32 to vector<8x128xf32>
    %317 = arith.mulf %316, %315 : vector<8x128xf32>
    %c0_147 = arith.constant 0 : index
    %c0_148 = arith.constant 0 : index
    %318 = vector.load %arg7[%c0_147, %c0_148] : memref<8x128xf32, #tpu.memory_space<vmem>>, vector<8x128xf32>
    %319 = arith.mulf %307, %318 : vector<8x128xf32>
    %320 = arith.mulf %299, %309 : vector<8x128xf32>
    %321 = arith.addf %319, %320 : vector<8x128xf32>
    %322 = math.tanh %321 : vector<8x128xf32>
    %323 = arith.mulf %317, %322 : vector<8x128xf32>
    %c0_149 = arith.constant 0 : index
    %c0_150 = arith.constant 0 : index
    %324 = vector.load %arg7[%c0_149, %c0_150] : memref<8x128xf32, #tpu.memory_space<vmem>>, vector<8x128xf32>
    tpu.vector_store %arg7[%c0_149, %c0_150], %321 {strides = array<i32>} : memref<8x128xf32, #tpu.memory_space<vmem>>, vector<8x128xf32>,
    %c0_151 = arith.constant 0 : index
    %c0_152 = arith.constant 0 : index
    %325 = vector.load %arg6[%c0_151, %c0_152] : memref<8x128xf32, #tpu.memory_space<vmem>>, vector<8x128xf32>
    tpu.vector_store %arg6[%c0_151, %c0_152], %323 {strides = array<i32>} : memref<8x128xf32, #tpu.memory_space<vmem>>, vector<8x128xf32>,
    %326 = arith.truncf %323 : vector<8x128xf32> to vector<8x128xbf16>
    %327 = arith.index_cast %281 : i32 to index
    %c0_153 = arith.constant 0 : index
    %c0_154 = arith.constant 0 : index
    %328 = vector.load %arg5[%327, %c0_153, %c0_154] : memref<8x8x128xbf16, #tpu.memory_space<vmem>>, vector<1x8x128xbf16>
    %329 = vector.shape_cast %328 : vector<1x8x128xbf16> to vector<8x128xbf16>
    %330 = vector.shape_cast %326 : vector<8x128xbf16> to vector<1x8x128xbf16>
    tpu.vector_store %arg5[%327, %c0_153, %c0_154], %330 {strides = array<i32>} : memref<8x8x128xbf16, #tpu.memory_space<vmem>>, vector<1x8x128xbf16>,
    %c6_i32 = arith.constant 6 : i32
    %c7_i32_155 = arith.constant 7 : i32
    %331 = arith.muli %arg0, %c7_i32_155 : i32
    %c2_i32_156 = arith.constant 2 : i32
    %332 = arith.muli %c2_i32_156, %arg0 : i32
    %c1_i32_157 = arith.constant 1 : i32
    %333 = arith.subi %c1_i32_157, %332 : i32
    %334 = arith.muli %333, %c6_i32 : i32
    %335 = arith.addi %331, %334 : i32
    %336 = arith.index_cast %335 : i32 to index
    %c0_158 = arith.constant 0 : index
    %c0_159 = arith.constant 0 : index
    %337 = vector.load %arg2[%336, %c0_158, %c0_159] : memref<8x8x512xbf16, #tpu.memory_space<vmem>>, vector<1x8x512xbf16>
    %338 = vector.shape_cast %337 : vector<1x8x512xbf16> to vector<8x512xbf16>
    %339 = arith.extf %338 : vector<8x512xbf16> to vector<8x512xf32>
    %340 = vector.broadcast %6 : vector<1x512xf32> to vector<8x512xf32>
    %341 = arith.addf %339, %340 : vector<8x512xf32>
    %c0_160 = arith.constant 0 : index
    %c0_161 = arith.constant 0 : index
    %342 = vector.load %arg6[%c0_160, %c0_161] : memref<8x128xf32, #tpu.memory_space<vmem>>, vector<8x128xf32>
    %343 = arith.truncf %342 : vector<8x128xf32> to vector<8x128xbf16>
    %cst_162 = arith.constant dense<0.000000e+00> : vector<8x512xf32>
    %344 = tpu.matmul %343, %4, %cst_162 {dimension_numbers = #tpu.dot_dimension_numbers<[1], [0], [0], [1], [0, 0, 1, 1], [], []>} : vector<8x128xbf16>, vector<128x512xbf16>, vector<8x512xf32> -> vector<8x512xf32>
    %345 = arith.addf %341, %344 : vector<8x512xf32>
    %346 = vector.extract_strided_slice %345 {offsets = [0, 0], sizes = [8, 128], strides = [1, 1]} : vector<8x512xf32> to vector<8x128xf32>
    %cst_163 = arith.constant 5.000000e-01 : f32
    %347 = vector.broadcast %cst_163 : f32 to vector<8x128xf32>
    %348 = arith.mulf %347, %346 : vector<8x128xf32>
    %349 = math.tanh %348 : vector<8x128xf32>
    %cst_164 = arith.constant 1.000000e+00 : f32
    %350 = vector.broadcast %cst_164 : f32 to vector<8x128xf32>
    %351 = arith.addf %350, %349 : vector<8x128xf32>
    %cst_165 = arith.constant 5.000000e-01 : f32
    %352 = vector.broadcast %cst_165 : f32 to vector<8x128xf32>
    %353 = arith.mulf %352, %351 : vector<8x128xf32>
    %354 = vector.extract_strided_slice %345 {offsets = [0, 128], sizes = [8, 128], strides = [1, 1]} : vector<8x512xf32> to vector<8x128xf32>
    %cst_166 = arith.constant 5.000000e-01 : f32
    %355 = vector.broadcast %cst_166 : f32 to vector<8x128xf32>
    %356 = arith.mulf %355, %354 : vector<8x128xf32>
    %357 = math.tanh %356 : vector<8x128xf32>
    %cst_167 = arith.constant 1.000000e+00 : f32
    %358 = vector.broadcast %cst_167 : f32 to vector<8x128xf32>
    %359 = arith.addf %358, %357 : vector<8x128xf32>
    %cst_168 = arith.constant 5.000000e-01 : f32
    %360 = vector.broadcast %cst_168 : f32 to vector<8x128xf32>
    %361 = arith.mulf %360, %359 : vector<8x128xf32>
    %362 = vector.extract_strided_slice %345 {offsets = [0, 256], sizes = [8, 128], strides = [1, 1]} : vector<8x512xf32> to vector<8x128xf32>
    %363 = math.tanh %362 : vector<8x128xf32>
    %364 = vector.extract_strided_slice %345 {offsets = [0, 384], sizes = [8, 128], strides = [1, 1]} : vector<8x512xf32> to vector<8x128xf32>
    %cst_169 = arith.constant 5.000000e-01 : f32
    %365 = vector.broadcast %cst_169 : f32 to vector<8x128xf32>
    %366 = arith.mulf %365, %364 : vector<8x128xf32>
    %367 = math.tanh %366 : vector<8x128xf32>
    %cst_170 = arith.constant 1.000000e+00 : f32
    %368 = vector.broadcast %cst_170 : f32 to vector<8x128xf32>
    %369 = arith.addf %368, %367 : vector<8x128xf32>
    %cst_171 = arith.constant 5.000000e-01 : f32
    %370 = vector.broadcast %cst_171 : f32 to vector<8x128xf32>
    %371 = arith.mulf %370, %369 : vector<8x128xf32>
    %c0_172 = arith.constant 0 : index
    %c0_173 = arith.constant 0 : index
    %372 = vector.load %arg7[%c0_172, %c0_173] : memref<8x128xf32, #tpu.memory_space<vmem>>, vector<8x128xf32>
    %373 = arith.mulf %361, %372 : vector<8x128xf32>
    %374 = arith.mulf %353, %363 : vector<8x128xf32>
    %375 = arith.addf %373, %374 : vector<8x128xf32>
    %376 = math.tanh %375 : vector<8x128xf32>
    %377 = arith.mulf %371, %376 : vector<8x128xf32>
    %c0_174 = arith.constant 0 : index
    %c0_175 = arith.constant 0 : index
    %378 = vector.load %arg7[%c0_174, %c0_175] : memref<8x128xf32, #tpu.memory_space<vmem>>, vector<8x128xf32>
    tpu.vector_store %arg7[%c0_174, %c0_175], %375 {strides = array<i32>} : memref<8x128xf32, #tpu.memory_space<vmem>>, vector<8x128xf32>,
    %c0_176 = arith.constant 0 : index
    %c0_177 = arith.constant 0 : index
    %379 = vector.load %arg6[%c0_176, %c0_177] : memref<8x128xf32, #tpu.memory_space<vmem>>, vector<8x128xf32>
    tpu.vector_store %arg6[%c0_176, %c0_177], %377 {strides = array<i32>} : memref<8x128xf32, #tpu.memory_space<vmem>>, vector<8x128xf32>,
    %380 = arith.truncf %377 : vector<8x128xf32> to vector<8x128xbf16>
    %381 = arith.index_cast %335 : i32 to index
    %c0_178 = arith.constant 0 : index
    %c0_179 = arith.constant 0 : index
    %382 = vector.load %arg5[%381, %c0_178, %c0_179] : memref<8x8x128xbf16, #tpu.memory_space<vmem>>, vector<1x8x128xbf16>
    %383 = vector.shape_cast %382 : vector<1x8x128xbf16> to vector<8x128xbf16>
    %384 = vector.shape_cast %380 : vector<8x128xbf16> to vector<1x8x128xbf16>
    tpu.vector_store %arg5[%381, %c0_178, %c0_179], %384 {strides = array<i32>} : memref<8x8x128xbf16, #tpu.memory_space<vmem>>, vector<1x8x128xbf16>,
    %c7_i32_180 = arith.constant 7 : i32
    %c7_i32_181 = arith.constant 7 : i32
    %385 = arith.muli %arg0, %c7_i32_181 : i32
    %c2_i32_182 = arith.constant 2 : i32
    %386 = arith.muli %c2_i32_182, %arg0 : i32
    %c1_i32_183 = arith.constant 1 : i32
    %387 = arith.subi %c1_i32_183, %386 : i32
    %388 = arith.muli %387, %c7_i32_180 : i32
    %389 = arith.addi %385, %388 : i32
    %390 = arith.index_cast %389 : i32 to index
    %c0_184 = arith.constant 0 : index
    %c0_185 = arith.constant 0 : index
    %391 = vector.load %arg2[%390, %c0_184, %c0_185] : memref<8x8x512xbf16, #tpu.memory_space<vmem>>, vector<1x8x512xbf16>
    %392 = vector.shape_cast %391 : vector<1x8x512xbf16> to vector<8x512xbf16>
    %393 = arith.extf %392 : vector<8x512xbf16> to vector<8x512xf32>
    %394 = vector.broadcast %6 : vector<1x512xf32> to vector<8x512xf32>
    %395 = arith.addf %393, %394 : vector<8x512xf32>
    %c0_186 = arith.constant 0 : index
    %c0_187 = arith.constant 0 : index
    %396 = vector.load %arg6[%c0_186, %c0_187] : memref<8x128xf32, #tpu.memory_space<vmem>>, vector<8x128xf32>
    %397 = arith.truncf %396 : vector<8x128xf32> to vector<8x128xbf16>
    %cst_188 = arith.constant dense<0.000000e+00> : vector<8x512xf32>
    %398 = tpu.matmul %397, %4, %cst_188 {dimension_numbers = #tpu.dot_dimension_numbers<[1], [0], [0], [1], [0, 0, 1, 1], [], []>} : vector<8x128xbf16>, vector<128x512xbf16>, vector<8x512xf32> -> vector<8x512xf32>
    %399 = arith.addf %395, %398 : vector<8x512xf32>
    %400 = vector.extract_strided_slice %399 {offsets = [0, 0], sizes = [8, 128], strides = [1, 1]} : vector<8x512xf32> to vector<8x128xf32>
    %cst_189 = arith.constant 5.000000e-01 : f32
    %401 = vector.broadcast %cst_189 : f32 to vector<8x128xf32>
    %402 = arith.mulf %401, %400 : vector<8x128xf32>
    %403 = math.tanh %402 : vector<8x128xf32>
    %cst_190 = arith.constant 1.000000e+00 : f32
    %404 = vector.broadcast %cst_190 : f32 to vector<8x128xf32>
    %405 = arith.addf %404, %403 : vector<8x128xf32>
    %cst_191 = arith.constant 5.000000e-01 : f32
    %406 = vector.broadcast %cst_191 : f32 to vector<8x128xf32>
    %407 = arith.mulf %406, %405 : vector<8x128xf32>
    %408 = vector.extract_strided_slice %399 {offsets = [0, 128], sizes = [8, 128], strides = [1, 1]} : vector<8x512xf32> to vector<8x128xf32>
    %cst_192 = arith.constant 5.000000e-01 : f32
    %409 = vector.broadcast %cst_192 : f32 to vector<8x128xf32>
    %410 = arith.mulf %409, %408 : vector<8x128xf32>
    %411 = math.tanh %410 : vector<8x128xf32>
    %cst_193 = arith.constant 1.000000e+00 : f32
    %412 = vector.broadcast %cst_193 : f32 to vector<8x128xf32>
    %413 = arith.addf %412, %411 : vector<8x128xf32>
    %cst_194 = arith.constant 5.000000e-01 : f32
    %414 = vector.broadcast %cst_194 : f32 to vector<8x128xf32>
    %415 = arith.mulf %414, %413 : vector<8x128xf32>
    %416 = vector.extract_strided_slice %399 {offsets = [0, 256], sizes = [8, 128], strides = [1, 1]} : vector<8x512xf32> to vector<8x128xf32>
    %417 = math.tanh %416 : vector<8x128xf32>
    %418 = vector.extract_strided_slice %399 {offsets = [0, 384], sizes = [8, 128], strides = [1, 1]} : vector<8x512xf32> to vector<8x128xf32>
    %cst_195 = arith.constant 5.000000e-01 : f32
    %419 = vector.broadcast %cst_195 : f32 to vector<8x128xf32>
    %420 = arith.mulf %419, %418 : vector<8x128xf32>
    %421 = math.tanh %420 : vector<8x128xf32>
    %cst_196 = arith.constant 1.000000e+00 : f32
    %422 = vector.broadcast %cst_196 : f32 to vector<8x128xf32>
    %423 = arith.addf %422, %421 : vector<8x128xf32>
    %cst_197 = arith.constant 5.000000e-01 : f32
    %424 = vector.broadcast %cst_197 : f32 to vector<8x128xf32>
    %425 = arith.mulf %424, %423 : vector<8x128xf32>
    %c0_198 = arith.constant 0 : index
    %c0_199 = arith.constant 0 : index
    %426 = vector.load %arg7[%c0_198, %c0_199] : memref<8x128xf32, #tpu.memory_space<vmem>>, vector<8x128xf32>
    %427 = arith.mulf %415, %426 : vector<8x128xf32>
    %428 = arith.mulf %407, %417 : vector<8x128xf32>
    %429 = arith.addf %427, %428 : vector<8x128xf32>
    %430 = math.tanh %429 : vector<8x128xf32>
    %431 = arith.mulf %425, %430 : vector<8x128xf32>
    %c0_200 = arith.constant 0 : index
    %c0_201 = arith.constant 0 : index
    %432 = vector.load %arg7[%c0_200, %c0_201] : memref<8x128xf32, #tpu.memory_space<vmem>>, vector<8x128xf32>
    tpu.vector_store %arg7[%c0_200, %c0_201], %429 {strides = array<i32>} : memref<8x128xf32, #tpu.memory_space<vmem>>, vector<8x128xf32>,
    %c0_202 = arith.constant 0 : index
    %c0_203 = arith.constant 0 : index
    %433 = vector.load %arg6[%c0_202, %c0_203] : memref<8x128xf32, #tpu.memory_space<vmem>>, vector<8x128xf32>
    tpu.vector_store %arg6[%c0_202, %c0_203], %431 {strides = array<i32>} : memref<8x128xf32, #tpu.memory_space<vmem>>, vector<8x128xf32>,
    %434 = arith.truncf %431 : vector<8x128xf32> to vector<8x128xbf16>
    %435 = arith.index_cast %389 : i32 to index
    %c0_204 = arith.constant 0 : index
    %c0_205 = arith.constant 0 : index
    %436 = vector.load %arg5[%435, %c0_204, %c0_205] : memref<8x8x128xbf16, #tpu.memory_space<vmem>>, vector<1x8x128xbf16>
    %437 = vector.shape_cast %436 : vector<1x8x128xbf16> to vector<8x128xbf16>
    %438 = vector.shape_cast %434 : vector<8x128xbf16> to vector<1x8x128xbf16>
    tpu.vector_store %arg5[%435, %c0_204, %c0_205], %438 {strides = array<i32>} : memref<8x8x128xbf16, #tpu.memory_space<vmem>>, vector<1x8x128xbf16>,
    %c8_i32 = arith.constant 8 : i32
    return
  }
  func.func @transform_0(%arg0: i32, %arg1: i32) -> (i32, i32, i32) {
    %c0_i32 = arith.constant 0 : i32
    %0 = arith.muli %arg0, %c0_i32 : i32
    %c2_i32 = arith.constant 2 : i32
    %1 = arith.muli %c2_i32, %arg0 : i32
    %c1_i32 = arith.constant 1 : i32
    %2 = arith.subi %c1_i32, %1 : i32
    %3 = arith.muli %2, %arg1 : i32
    %4 = arith.addi %0, %3 : i32
    %c0_i32_0 = arith.constant 0 : i32
    %c0_i32_1 = arith.constant 0 : i32
    return %4, %c0_i32_0, %arg0 : i32, i32, i32
  }
  func.func @transform_1(%arg0: i32, %arg1: i32) -> (i32, i32, i32) {
    %c0_i32 = arith.constant 0 : i32
    %c0_i32_0 = arith.constant 0 : i32
    %c0_i32_1 = arith.constant 0 : i32
    return %arg0, %c0_i32, %c0_i32_0 : i32, i32, i32
  }
  func.func @transform_2(%arg0: i32, %arg1: i32) -> (i32, i32, i32) {
    %c0_i32 = arith.constant 0 : i32
    %c0_i32_0 = arith.constant 0 : i32
    %c0_i32_1 = arith.constant 0 : i32
    return %arg0, %c0_i32, %c0_i32_0 : i32, i32, i32
  }
  func.func @transform_3(%arg0: i32, %arg1: i32) -> (i32, i32, i32) {
    %c0_i32 = arith.constant 0 : i32
    %0 = arith.muli %arg0, %c0_i32 : i32
    %c2_i32 = arith.constant 2 : i32
    %1 = arith.muli %c2_i32, %arg0 : i32
    %c1_i32 = arith.constant 1 : i32
    %2 = arith.subi %c1_i32, %1 : i32
    %3 = arith.muli %2, %arg1 : i32
    %4 = arith.addi %0, %3 : i32
    %c0_i32_0 = arith.constant 0 : i32
    %c0_i32_1 = arith.constant 0 : i32
    return %4, %c0_i32_0, %arg0 : i32, i32, i32
  }
}

</mosaic_0001>

<llo_original>
// kernel: tpu_custom_call.1
$region0: #{tpu_custom_call.1}
  #allocation0 [shape = 'u32[]', space=smem, size = 0x4, offset = 0x4, fixed_abs, tag = 'smem constant byte address 0x4 - core index']
  #allocation1 [shape = 'u32[144,128]{1,0:T(1,128)}', space=vmem, size = 0x12000, scoped, tag = 'internal scratch']
  #allocation2 [shape = 'f32[8,128]{1,0:T(8,128)}', space=vmem, size = 0x1000, scoped, tag = 'scratch operand']
  #allocation3 [shape = 'f32[8,128]{1,0:T(8,128)}', space=vmem, size = 0x1000, scoped, tag = 'scratch operand']
  %s0 = inlined_call_operand.hbm [shape: bf16[8,8,1024], index: 0, kind: input, shape index: {}]
  %s1 = inlined_call_operand.hbm [shape: f32[2,1,512], index: 1, kind: input, shape index: {}]
  %s2 = inlined_call_operand.hbm [shape: bf16[2,128,512], index: 2, kind: input, shape index: {}]
  %s3 = inlined_call_operand.hbm [shape: bf16[8,8,256], index: 3, kind: output, shape index: {}]
  %s4 = sld [smem:[#allocation0]]
  $region61: #{tpu_custom_call.1} parent=0
    _
  %s6 = ssub.s32 1, %s4
  %s7 = scalar_select 0, %s6, %s4
  $region1: #{tpu_custom_call.1} parent=0
    #allocation4 [shape = 'u8[131072]{0}', space=vmem, size = 0x20000, scoped, tag = 'input window, operand 0']
    #allocation5 [shape = 's32[2]{0}', space=sflag, size = 0x8, scoped, tag = 'scoped memory for tpu_custom_call.1']
    #allocation6 [shape = 's32[2]{0}', space=sflag, size = 0x8, scoped, tag = 'scoped memory for tpu_custom_call.1']
    #allocation7 [shape = 'u8[4096]{0}', space=vmem, size = 0x1000, scoped, tag = 'input window, operand 1']
    #allocation8 [shape = 's32[2]{0}', space=sflag, size = 0x8, scoped, tag = 'scoped memory for tpu_custom_call.1']
    #allocation9 [shape = 'u8[131072]{0}', space=vmem, size = 0x20000, scoped, tag = 'input window, operand 2, single buffered']
    #allocation10 [shape = 'u8[32768]{0}', space=vmem, size = 0x8000, scoped, tag = 'output window, operand 0']
    %8 = vsyncpa [#allocation5], 0
    %s9 = scalar_lea.sflag [#allocation5], 1
    %10 = vsyncpa %s9, 0
    %11 = vsyncpa [#allocation8], 0
    %s12 = scalar_lea.sflag [#allocation8], 1
    %13 = vsyncpa %s12, 0
    %14 = vsyncpa [#allocation6], 0
    %s15 = scalar_lea.sflag [#allocation6], 1
    %16 = vsyncpa %s15, 0
    loop: start=0, step=1, limit=4
    $region2: #{tpu_custom_call.1} parent=1 // loop_pre_header
      _
    $region3: #{tpu_custom_call.1} parent=1 // loop_header
      %s18 = sphi 0, %s22
      %p19 = scmp.ge.s32.totalorder %s18, 4
      %s25 = sphi 0, %s37
      %s26 = sphi 0, %s33
      %s27 = sphi 0, %s25
      %s28 = sphi 0, %s26
      %s29 = sphi 0, %s27
      %s30 = sphi 0, %s28
      %s48 = sphi 0, %s50
      %s51 = sphi 0, %s48
      %s52 = sphi 0, %s51
      %s68 = sphi 0, %s52
      %s74 = sphi 0, %s76
      %s77 = sphi 0, %s74
      %s78 = sphi 0, %s77
      %s94 = sphi 0, %s78
      %s100 = sphi 0, %s102
      %s103 = sphi 0, %s100
      %s104 = sphi 0, %s103
      %s120 = sphi 0, %s104
      %s134 = sphi 0, %s136
      %s137 = sphi 0, %s134
      %s138 = sphi 0, %s137
      %s154 = sphi 0, %s138
    $region4: #{tpu_custom_call.1} parent=1 // loop_header_branch
      %21 = sbr.rel (%p19) target = $region8
    $region5: #{tpu_custom_call.1} parent=1 // loop_body
      %s23 = ssub.s32 %s18, 1
      %s24 = ssub.s32 %s18, 2
      %s31 = sadd.s32 1, %s26
      %p32 = scmp.ge.s32.totalorder %s31, 1
      %s33 = scalar_select %p32, 0, %s31
      %s34 = sadd.s32 1, %s25
      %s35 = scalar_select %p32, %s34, %s25
      %p36 = scmp.ge.s32.totalorder %s35, 2
      %s37 = scalar_select %p36, 0, %s35
      %s38 = smul.u32 %s25, 2
      %s39 = ssub.s32 1, %s38
      %s40 = smul.u32 %s39, %s26
      %s41 = smul.u32 %s37, 2
      %s42 = ssub.s32 1, %s41
      %s43 = smul.u32 %s42, %s33
      %s44 = ssub.s32 %s40, %s43
      %s45 = ssub.s32 %s25, %s37
      %s46 = sor.u32 %s44, %s45
      %p47 = scmp.eq.s32.totalorder %s46, 0
      %s49 = sadd.s32 %s48, 1
      %s50 = scalar_select %p47, %s48, %s49
      %p53 = pneg %p47
      %p54 = scmp.eq.s32.totalorder %s18, 1
      %p55 = por %p53, %p54
      %p56 = scmp.ne.s32.totalorder %s48, %s51
      %p57 = scmp.eq.s32.totalorder %s18, 0
      %p58 = por %p56, %p57
      %p59 = scmp.ne.s32.totalorder %s48, %s51
      %p60 = scmp.eq.s32.totalorder %s23, 1
      %p61 = por %p59, %p60
      %p62 = scmp.ne.s32.totalorder %s51, %s52
      %p63 = scmp.eq.s32.totalorder %s23, 0
      %p64 = por %p62, %p63
      %p65 = scmp.ne.s32.totalorder %s51, %s52
      %p66 = scmp.eq.s32.totalorder %s24, 1
      %p67 = por %p65, %p66
      %p69 = scmp.ne.s32.totalorder %s52, %s68
      %p70 = scmp.eq.s32.totalorder %s24, 0
      %p71 = por %p69, %p70
      %s72 = ssub.s32 %s25, %s37
      %p73 = scmp.eq.s32.totalorder %s72, 0
      %s75 = sadd.s32 %s74, 1
      %s76 = scalar_select %p73, %s74, %s75
      %p79 = pneg %p73
      %p80 = scmp.eq.s32.totalorder %s18, 1
      %p81 = por %p79, %p80
      %p82 = scmp.ne.s32.totalorder %s74, %s77
      %p83 = scmp.eq.s32.totalorder %s18, 0
      %p84 = por %p82, %p83
      %p85 = scmp.ne.s32.totalorder %s74, %s77
      %p86 = scmp.eq.s32.totalorder %s23, 1
      %p87 = por %p85, %p86
      %p88 = scmp.ne.s32.totalorder %s77, %s78
      %p89 = scmp.eq.s32.totalorder %s23, 0
      %p90 = por %p88, %p89
      %p91 = scmp.ne.s32.totalorder %s77, %s78
      %p92 = scmp.eq.s32.totalorder %s24, 1
      %p93 = por %p91, %p92
      %p95 = scmp.ne.s32.totalorder %s78, %s94
      %p96 = scmp.eq.s32.totalorder %s24, 0
      %p97 = por %p95, %p96
      %s98 = ssub.s32 %s25, %s37
      %p99 = scmp.eq.s32.totalorder %s98, 0
      %s101 = sadd.s32 %s100, 1
      %s102 = scalar_select %p99, %s100, %s101
      %p105 = pneg %p99
      %p106 = scmp.eq.s32.totalorder %s18, 1
      %p107 = por %p105, %p106
      %p108 = scmp.ne.s32.totalorder %s100, %s103
      %p109 = scmp.eq.s32.totalorder %s18, 0
      %p110 = por %p108, %p109
      %p111 = scmp.ne.s32.totalorder %s100, %s103
      %p112 = scmp.eq.s32.totalorder %s23, 1
      %p113 = por %p111, %p112
      %p114 = scmp.ne.s32.totalorder %s103, %s104
      %p115 = scmp.eq.s32.totalorder %s23, 0
      %p116 = por %p114, %p115
      %p117 = scmp.ne.s32.totalorder %s103, %s104
      %p118 = scmp.eq.s32.totalorder %s24, 1
      %p119 = por %p117, %p118
      %p121 = scmp.ne.s32.totalorder %s104, %s120
      %p122 = scmp.eq.s32.totalorder %s24, 0
      %p123 = por %p121, %p122
      %s124 = smul.u32 %s25, 2
      %s125 = ssub.s32 1, %s124
      %s126 = smul.u32 %s125, %s26
      %s127 = smul.u32 %s37, 2
      %s128 = ssub.s32 1, %s127
      %s129 = smul.u32 %s128, %s33
      %s130 = ssub.s32 %s126, %s129
      %s131 = ssub.s32 %s25, %s37
      %s132 = sor.u32 %s130, %s131
      %p133 = scmp.eq.s32.totalorder %s132, 0
      %s135 = sadd.s32 %s134, 1
      %s136 = scalar_select %p133, %s134, %s135
      %p139 = pneg %p133
      %p140 = scmp.eq.s32.totalorder %s18, 1
      %p141 = por %p139, %p140
      %p142 = scmp.ne.s32.totalorder %s134, %s137
      %p143 = scmp.eq.s32.totalorder %s18, 0
      %p144 = por %p142, %p143
      %p145 = scmp.ne.s32.totalorder %s134, %s137
      %p146 = scmp.eq.s32.totalorder %s23, 1
      %p147 = por %p145, %p146
      %p148 = scmp.ne.s32.totalorder %s137, %s138
      %p149 = scmp.eq.s32.totalorder %s23, 0
      %p150 = por %p148, %p149
      %p151 = scmp.ne.s32.totalorder %s137, %s138
      %p152 = scmp.eq.s32.totalorder %s24, 1
      %p153 = por %p151, %p152
      %p155 = scmp.ne.s32.totalorder %s138, %s154
      %p156 = scmp.eq.s32.totalorder %s24, 0
      %p157 = por %p155, %p156
      %p158 = scmp.le.s32.totalorder 1, %s18
      %p159 = scmp.lt.s32.totalorder %s18, 3
      %p160 = pnand %p158, %p159
      %p161 = pneg %p160
      // Predicated region
      $region9: #{tpu_custom_call.1} parent=5 // pred_check
        _
      $region10: #{tpu_custom_call.1} parent=5 // pred_check_branch
        %163 = sbr.rel (%p160) target = $region12
      $region11: #{tpu_custom_call.1} parent=5 // pred_region
        %s164 = ssub.s32 %s18, 1
        // Predicated region
        $region13: #{tpu_custom_call.1} parent=11 // pred_check
          %p165 = pneg %p116
        $region14: #{tpu_custom_call.1} parent=11 // pred_check_branch
          %167 = sbr.rel (%p165) target = $region16
        $region15: #{tpu_custom_call.1} parent=11 // pred_region
          %s169 = ssub.s32 4096, 4096
          %170 = vsyncadd [#allocation8], %s169
          %s171 = smul.addr %s27, 64
          %s172 = smul.addr %s171, 64
          %s173 = scalar_lea.hbm %s2, %s172
          %s174 = sshll.u32 [#allocation9], 4
          %s175 = int_to_ptr.vmem [resolvable:$true] %s174
          %180 = dma.hbm_to_vmem [thread:$0]  %s173, 4096, %s175, [#allocation8], 256, 256, 16
        $region16: #{tpu_custom_call.1} parent=11 // pred_fallthru
          _
      $region12: #{tpu_custom_call.1} parent=5 // pred_fallthru
        _
      %p181 = scmp.lt.s32.totalorder %s18, 2
      // Predicated region
      $region17: #{tpu_custom_call.1} parent=5 // pred_check
        %p182 = pneg %p181
      $region18: #{tpu_custom_call.1} parent=5 // pred_check_branch
        %184 = sbr.rel (%p182) target = $region20
      $region19: #{tpu_custom_call.1} parent=5 // pred_region
        // Predicated region
        $region21: #{tpu_custom_call.1} parent=19 // pred_check
          %p185 = pneg %p58
        $region22: #{tpu_custom_call.1} parent=19 // pred_check_branch
          %187 = sbr.rel (%p185) target = $region24
        $region23: #{tpu_custom_call.1} parent=19 // pred_region
          %s188 = sand.u32 %s48, 1
          %s189 = scalar_lea.sflag [#allocation5], %s188
          %s190 = sand.u32 %s48, 1
          %s191 = smul.addr %s190, 128
          %s192 = scalar_lea.vmem [#allocation4], %s191
          %s193 = smul.u32 %s25, 2
          %s194 = ssub.s32 1, %s193
          %s195 = smul.u32 %s194, %s26
          %s196 = smul.u32 8, %s195
          %s197 = smul.u32 4, %s25
          %s199 = ssub.s32 2048, 2048
          %200 = vsyncadd %s189, %s199
          %s201 = smul.addr %s196, 8
          %s202 = sadd.s32 %s197, %s201
          %s203 = smul.addr %s202, 64
          %s204 = scalar_lea.hbm %s0, %s203
          %s205 = sshll.u32 %s192, 4
          %s206 = int_to_ptr.vmem [resolvable:$true] %s205
          %211 = dma.hbm_to_vmem [thread:$0]  %s204, 2048, %s206, %s189, 512, 256, 16
        $region24: #{tpu_custom_call.1} parent=19 // pred_fallthru
          _
        // Predicated region
        $region25: #{tpu_custom_call.1} parent=19 // pred_check
          %p212 = pneg %p84
        $region26: #{tpu_custom_call.1} parent=19 // pred_check_branch
          %214 = sbr.rel (%p212) target = $region28
        $region27: #{tpu_custom_call.1} parent=19 // pred_region
          %s215 = sand.u32 %s18, 1
          %s216 = scalar_lea.sflag [#allocation8], %s215
          %s217 = sand.u32 %s74, 1
          %s218 = smul.addr %s217, 4
          %s219 = scalar_lea.vmem [#allocation7], %s218
          %s221 = ssub.s32 64, 64
          %222 = vsyncadd %s216, %s221
          %s223 = smul.addr %s25, 4
          %s224 = smul.addr %s223, 16
          %s225 = scalar_lea.hbm %s1, %s224
          %s227 = sshll.u32 %s219, 4
          %s228 = int_to_ptr.vmem [resolvable:$true] %s227
          %230 = dma.hbm_to_vmem [thread:$0]  %s225, 64, %s228, %s216
        $region28: #{tpu_custom_call.1} parent=19 // pred_fallthru
          _
      $region20: #{tpu_custom_call.1} parent=5 // pred_fallthru
        _
      %p231 = scmp.le.s32.totalorder 1, %s18
      %p232 = scmp.lt.s32.totalorder %s18, 3
      %p233 = pnand %p231, %p232
      %p234 = pneg %p233
      // Predicated region
      $region29: #{tpu_custom_call.1} parent=5 // pred_check
        _
      $region30: #{tpu_custom_call.1} parent=5 // pred_check_branch
        %236 = sbr.rel (%p233) target = $region32
      $region31: #{tpu_custom_call.1} parent=5 // pred_region
        %s237 = ssub.s32 %s18, 1
        %s238 = sand.u32 %s51, 1
        %s239 = scalar_lea.sflag [#allocation5], %s238
        %s240 = sand.u32 %s51, 1
        %s241 = smul.addr %s240, 128
        %s242 = scalar_lea.vmem [#allocation4], %s241
        // Predicated region
        $region33: #{tpu_custom_call.1} parent=31 // pred_check
          %p243 = pneg %p64
        $region34: #{tpu_custom_call.1} parent=31 // pred_check_branch
          %245 = sbr.rel (%p243) target = $region36
        $region35: #{tpu_custom_call.1} parent=31 // pred_region
          %246 = dma.done %s239, 2048
        $region36: #{tpu_custom_call.1} parent=31 // pred_fallthru
          _
        %s247 = sand.u32 %s23, 1
        %s248 = scalar_lea.sflag [#allocation8], %s247
        %s249 = sand.u32 %s77, 1
        %s250 = smul.addr %s249, 4
        %s251 = scalar_lea.vmem [#allocation7], %s250
        // Predicated region
        $region37: #{tpu_custom_call.1} parent=31 // pred_check
          %p252 = pneg %p90
        $region38: #{tpu_custom_call.1} parent=31 // pred_check_branch
          %254 = sbr.rel (%p252) target = $region40
        $region39: #{tpu_custom_call.1} parent=31 // pred_region
          %255 = dma.done %s248, 64
        $region40: #{tpu_custom_call.1} parent=31 // pred_fallthru
          _
        // Predicated region
        $region41: #{tpu_custom_call.1} parent=31 // pred_check
          %p256 = pneg %p116
        $region42: #{tpu_custom_call.1} parent=31 // pred_check_branch
          %258 = sbr.rel (%p256) target = $region44
        $region43: #{tpu_custom_call.1} parent=31 // pred_region
          %259 = dma.done [#allocation8], 4096
        $region44: #{tpu_custom_call.1} parent=31 // pred_fallthru
          _
        %s260 = sand.u32 %s51, 1
        %s261 = scalar_lea.sflag [#allocation5], %s260
        %s262 = sand.u32 %s51, 1
        %s263 = smul.addr %s262, 128
        %s264 = scalar_lea.vmem [#allocation4], %s263
        %p265 = pneg %p64
        %p266 = pneg %p61
        %s267 = sand.u32 %s23, 1
        %s268 = scalar_lea.sflag [#allocation8], %s267
        %s269 = sand.u32 %s77, 1
        %s270 = smul.addr %s269, 4
        %s271 = scalar_lea.vmem [#allocation7], %s270
        %p272 = pneg %p90
        %p273 = pneg %p87
        %p274 = pneg %p116
        %p275 = pneg %p113
        %p276 = pneg %p150
        %p277 = pneg %p147
        %s278 = sand.u32 %s137, 1
        %s279 = scalar_lea.sflag [#allocation6], %s278
        %s280 = sand.u32 %s137, 1
        %s281 = smul.addr %s280, 32
        %s282 = scalar_lea.vmem [#allocation10], %s281
        %s283 = smul.u32 %s27, 2
        %s284 = ssub.s32 1, %s283
        %s285 = smul.u32 %s284, %s28
        %s286 = smul.u32 8, %s285
        %s287 = smul.u32 4, %s27
        %s288 = smul.u32 %s27, 2
        %s289 = ssub.s32 1, %s288
        %s290 = smul.u32 %s289, %s28
        %s291 = smul.u32 8, %s290
        %p293 = scmp.eq.s32.totalorder %s28, 0
        // Predicated region
        $region45: #{tpu_custom_call.1} parent=31 // pred_check
          %p294 = pneg %p293
        $region46: #{tpu_custom_call.1} parent=31 // pred_check_branch
          %296 = sbr.rel (%p294) target = $region48
        $region47: #{tpu_custom_call.1} parent=31 // pred_region
          %297 = vst [vmem:[#allocation2] sm:$0xff] 0.0
          %298 = vst [vmem:[#allocation3] sm:$0xff] 0.0
        $region48: #{tpu_custom_call.1} parent=31 // pred_fallthru
          _
        %v299 = vld [vmem:[#allocation9] sm:$0xff]
        %v300 = vld [vmem:[#allocation9 + $0x8] sm:$0xff]
        %v301 = vld [vmem:[#allocation9 + $0x10] sm:$0xff]
        %v302 = vld [vmem:[#allocation9 + $0x18] sm:$0xff]
        %v303 = vld [vmem:[#allocation9 + $0x20] sm:$0xff]
        %v304 = vld [vmem:[#allocation9 + $0x28] sm:$0xff]
        %v305 = vld [vmem:[#allocation9 + $0x30] sm:$0xff]
        %v306 = vld [vmem:[#allocation9 + $0x38] sm:$0xff]
        %v307 = vld [vmem:[#allocation9 + $0x40] sm:$0xff]
        %v308 = vld [vmem:[#allocation9 + $0x48] sm:$0xff]
        %v309 = vld [vmem:[#allocation9 + $0x50] sm:$0xff]
        %v310 = vld [vmem:[#allocation9 + $0x58] sm:$0xff]
        %v311 = vld [vmem:[#allocation9 + $0x60] sm:$0xff]
        %v312 = vld [vmem:[#allocation9 + $0x68] sm:$0xff]
        %v313 = vld [vmem:[#allocation9 + $0x70] sm:$0xff]
        %v314 = vld [vmem:[#allocation9 + $0x78] sm:$0xff]
        %v315 = vld [vmem:[#allocation9 + $0x80] sm:$0xff]
        %v316 = vld [vmem:[#allocation9 + $0x88] sm:$0xff]
        %v317 = vld [vmem:[#allocation9 + $0x90] sm:$0xff]
        %v318 = vld [vmem:[#allocation9 + $0x98] sm:$0xff]
        %v319 = vld [vmem:[#allocation9 + $0xa0] sm:$0xff]
        %v320 = vld [vmem:[#allocation9 + $0xa8] sm:$0xff]
        %v321 = vld [vmem:[#allocation9 + $0xb0] sm:$0xff]
        %v322 = vld [vmem:[#allocation9 + $0xb8] sm:$0xff]
        %v323 = vld [vmem:[#allocation9 + $0xc0] sm:$0xff]
        %v324 = vld [vmem:[#allocation9 + $0xc8] sm:$0xff]
        %v325 = vld [vmem:[#allocation9 + $0xd0] sm:$0xff]
        %v326 = vld [vmem:[#allocation9 + $0xd8] sm:$0xff]
        %v327 = vld [vmem:[#allocation9 + $0xe0] sm:$0xff]
        %v328 = vld [vmem:[#allocation9 + $0xe8] sm:$0xff]
        %v329 = vld [vmem:[#allocation9 + $0xf0] sm:$0xff]
        %v330 = vld [vmem:[#allocation9 + $0xf8] sm:$0xff]
        %v331 = vld [vmem:[%s251] sm:$0xf]
        %s332 = smul.u32 %s27, 7
        %s333 = smul.u32 %s332, 4
        %s334 = smul.addr %s333, 4
        %s335 = scalar_lea.vmem %s242, %s334 [#allocation4]
        %v336 = vld [vmem:[%s335] sm:$0xff]
        %v337 = vld [vmem:[%s335 + $0x8] sm:$0xff]
        %v338 = vunpack.c.l.bf16 %v336
        %v339 = vunpack.c.h.bf16 %v336
        %v340 = vunpack.c.l.bf16 %v337
        %v341 = vunpack.c.h.bf16 %v337
        %v343 = vlaneseq
        %v344 = vshrl.u32 %v343, 7
        %v345 = vsub.s32 0, %v344
        %v346 = vrot.slane %v331, %v345
        %v347 = vlaneseq
        %v348 = vshrl.u32 %v347, 7
        %v349 = vsub.s32 1, %v348
        %v350 = vrot.slane %v331, %v349
        %v351 = vlaneseq
        %v352 = vshrl.u32 %v351, 7
        %v353 = vsub.s32 2, %v352
        %v354 = vrot.slane %v331, %v353
        %v355 = vlaneseq
        %v356 = vshrl.u32 %v355, 7
        %v357 = vsub.s32 3, %v356
        %v358 = vrot.slane %v331, %v357
        %v363 = vadd.f32 %v338, %v346
        %v364 = vadd.f32 %v339, %v350
        %v365 = vadd.f32 %v340, %v354
        %v366 = vadd.f32 %v341, %v358
        %v367 = vld [vmem:[#allocation2] sm:$0xff]
        %v368 = vpack.c.bf16 %v367, %v367
        %v401 = vunpack.c.l.b16 %v299
        %v402 = vunpack.c.h.b16 %v299
        %v403 = vunpack.c.l.b16 %v300
        %v404 = vunpack.c.h.b16 %v300
        %v405 = vunpack.c.l.b16 %v301
        %v406 = vunpack.c.h.b16 %v301
        %v407 = vunpack.c.l.b16 %v302
        %v408 = vunpack.c.h.b16 %v302
        %v409 = vunpack.c.l.b16 %v303
        %v410 = vunpack.c.h.b16 %v303
        %v411 = vunpack.c.l.b16 %v304
        %v412 = vunpack.c.h.b16 %v304
        %v413 = vunpack.c.l.b16 %v305
        %v414 = vunpack.c.h.b16 %v305
        %v415 = vunpack.c.l.b16 %v306
        %v416 = vunpack.c.h.b16 %v306
        %v417 = vunpack.c.l.b16 %v307
        %v418 = vunpack.c.h.b16 %v307
        %v419 = vunpack.c.l.b16 %v308
        %v420 = vunpack.c.h.b16 %v308
        %v421 = vunpack.c.l.b16 %v309
        %v422 = vunpack.c.h.b16 %v309
        %v423 = vunpack.c.l.b16 %v310
        %v424 = vunpack.c.h.b16 %v310
        %v425 = vunpack.c.l.b16 %v311
        %v426 = vunpack.c.h.b16 %v311
        %v427 = vunpack.c.l.b16 %v312
        %v428 = vunpack.c.h.b16 %v312
        %v429 = vunpack.c.l.b16 %v313
        %v430 = vunpack.c.h.b16 %v313
        %v431 = vunpack.c.l.b16 %v314
        %v432 = vunpack.c.h.b16 %v314
        %v433 = vunpack.c.l.b16 %v315
        %v434 = vunpack.c.h.b16 %v315
        %v435 = vunpack.c.l.b16 %v316
        %v436 = vunpack.c.h.b16 %v316
        %v437 = vunpack.c.l.b16 %v317
        %v438 = vunpack.c.h.b16 %v317
        %v439 = vunpack.c.l.b16 %v318
        %v440 = vunpack.c.h.b16 %v318
        %v441 = vunpack.c.l.b16 %v319
        %v442 = vunpack.c.h.b16 %v319
        %v443 = vunpack.c.l.b16 %v320
        %v444 = vunpack.c.h.b16 %v320
        %v445 = vunpack.c.l.b16 %v321
        %v446 = vunpack.c.h.b16 %v321
        %v447 = vunpack.c.l.b16 %v322
        %v448 = vunpack.c.h.b16 %v322
        %v449 = vunpack.c.l.b16 %v323
        %v450 = vunpack.c.h.b16 %v323
        %v451 = vunpack.c.l.b16 %v324
        %v452 = vunpack.c.h.b16 %v324
        %v453 = vunpack.c.l.b16 %v325
        %v454 = vunpack.c.h.b16 %v325
        %v455 = vunpack.c.l.b16 %v326
        %v456 = vunpack.c.h.b16 %v326
        %v457 = vunpack.c.l.b16 %v327
        %v458 = vunpack.c.h.b16 %v327
        %v459 = vunpack.c.l.b16 %v328
        %v460 = vunpack.c.h.b16 %v328
        %v461 = vunpack.c.l.b16 %v329
        %v462 = vunpack.c.h.b16 %v329
        %v463 = vunpack.c.l.b16 %v330
        %v464 = vunpack.c.h.b16 %v330
        %v465 = vpack.c.b16 %v405, %v401
        %v466 = vpack.c.b16 %v406, %v402
        %v467 = vpack.c.b16 %v407, %v403
        %v468 = vpack.c.b16 %v408, %v404
        %v469 = vpack.c.b16 %v413, %v409
        %v470 = vpack.c.b16 %v414, %v410
        %v471 = vpack.c.b16 %v415, %v411
        %v472 = vpack.c.b16 %v416, %v412
        %v473 = vpack.c.b16 %v421, %v417
        %v474 = vpack.c.b16 %v422, %v418
        %v475 = vpack.c.b16 %v423, %v419
        %v476 = vpack.c.b16 %v424, %v420
        %v477 = vpack.c.b16 %v429, %v425
        %v478 = vpack.c.b16 %v430, %v426
        %v479 = vpack.c.b16 %v431, %v427
        %v480 = vpack.c.b16 %v432, %v428
        %v481 = vpack.c.b16 %v437, %v433
        %v482 = vpack.c.b16 %v438, %v434
        %v483 = vpack.c.b16 %v439, %v435
        %v484 = vpack.c.b16 %v440, %v436
        %v485 = vpack.c.b16 %v445, %v441
        %v486 = vpack.c.b16 %v446, %v442
        %v487 = vpack.c.b16 %v447, %v443
        %v488 = vpack.c.b16 %v448, %v444
        %v489 = vpack.c.b16 %v453, %v449
        %v490 = vpack.c.b16 %v454, %v450
        %v491 = vpack.c.b16 %v455, %v451
        %v492 = vpack.c.b16 %v456, %v452
        %v493 = vpack.c.b16 %v461, %v457
        %v494 = vpack.c.b16 %v462, %v458
        %v495 = vpack.c.b16 %v463, %v459
        %v496 = vpack.c.b16 %v464, %v460
        %529 = vmatprep.subr.bf16.mxu0 %v494
        %530 = vmatpush1.bf16.msra.mxu0 %v493
        %531 = vmatprep.subr.bf16.mxu0 %v490
        %532 = vmatpush1.bf16.msra.mxu0 %v489
        %533 = vmatprep.subr.bf16.mxu0 %v486
        %534 = vmatpush1.bf16.msra.mxu0 %v485
        %535 = vmatprep.subr.bf16.mxu0 %v482
        %536 = vmatpush1.bf16.msra.mxu0 %v481
        %537 = vmatprep.subr.bf16.mxu0 %v478
        %538 = vmatpush1.bf16.msra.mxu0 %v477
        %539 = vmatprep.subr.bf16.mxu0 %v474
        %540 = vmatpush1.bf16.msra.mxu0 %v473
        %541 = vmatprep.subr.bf16.mxu0 %v470
        %542 = vmatpush1.bf16.msra.mxu0 %v469
        %543 = vmatprep.subr.bf16.mxu0 %v466
        %544 = vmatpush1.bf16.msra.mxu0 %v465
        %545 = vmatprep.subr.bf16.mxu0 0
        %546 = vmatpush2.bf16.msra.mxu0 0
        %547 = vmatprep.subr.bf16.mxu0 0
        %548 = vmatpush2.bf16.msra.mxu0 0
        %549 = vmatprep.subr.bf16.mxu0 0
        %550 = vmatpush2.bf16.msra.mxu0 0
        %551 = vmatprep.subr.bf16.mxu0 0
        %552 = vmatpush2.bf16.msra.mxu0 0
        %553 = vmatprep.subr.bf16.mxu0 0
        %554 = vmatpush2.bf16.msra.mxu0 0
        %555 = vmatprep.subr.bf16.mxu0 0
        %556 = vmatpush2.bf16.msra.mxu0 0
        %557 = vmatprep.subr.bf16.mxu0 0
        %558 = vmatpush2.bf16.msra.mxu0 0
        %559 = vmatprep.subr.bf16.mxu0 0
        %560 = vmatpush2.bf16.msra.mxu0 0
        %561 = vmatprep.mubr.bf16.mxu0 0
        %562 = vmatmul.mubr.bf16.gmra.mxu0 %v368
        %v563 = vpop.f32.mrf.mxu0
        %v564 = vadd.f32 0.0, %v563
        %v565 = vpop.f32.mrf.mxu0
        %v566 = vadd.f32 0.0, %v565
        %v567 = vpop.f32.mrf.mxu0
        %v568 = vpop.f32.mrf.mxu0
        %569 = vdwg.mxu0
        %570 = vmatprep.subr.bf16.mxu0 %v496
        %571 = vmatpush1.bf16.msra.mxu0 %v495
        %572 = vmatprep.subr.bf16.mxu0 %v492
        %573 = vmatpush1.bf16.msra.mxu0 %v491
        %574 = vmatprep.subr.bf16.mxu0 %v488
        %575 = vmatpush1.bf16.msra.mxu0 %v487
        %576 = vmatprep.subr.bf16.mxu0 %v484
        %577 = vmatpush1.bf16.msra.mxu0 %v483
        %578 = vmatprep.subr.bf16.mxu0 %v480
        %579 = vmatpush1.bf16.msra.mxu0 %v479
        %580 = vmatprep.subr.bf16.mxu0 %v476
        %581 = vmatpush1.bf16.msra.mxu0 %v475
        %582 = vmatprep.subr.bf16.mxu0 %v472
        %583 = vmatpush1.bf16.msra.mxu0 %v471
        %584 = vmatprep.subr.bf16.mxu0 %v468
        %585 = vmatpush1.bf16.msra.mxu0 %v467
        %586 = vmatprep.subr.bf16.mxu0 0
        %587 = vmatpush2.bf16.msra.mxu0 0
        %588 = vmatprep.subr.bf16.mxu0 0
        %589 = vmatpush2.bf16.msra.mxu0 0
        %590 = vmatprep.subr.bf16.mxu0 0
        %591 = vmatpush2.bf16.msra.mxu0 0
        %592 = vmatprep.subr.bf16.mxu0 0
        %593 = vmatpush2.bf16.msra.mxu0 0
        %594 = vmatprep.subr.bf16.mxu0 0
        %595 = vmatpush2.bf16.msra.mxu0 0
        %596 = vmatprep.subr.bf16.mxu0 0
        %597 = vmatpush2.bf16.msra.mxu0 0
        %598 = vmatprep.subr.bf16.mxu0 0
        %599 = vmatpush2.bf16.msra.mxu0 0
        %600 = vmatprep.subr.bf16.mxu0 0
        %601 = vmatpush2.bf16.msra.mxu0 0
        %602 = vmatprep.mubr.bf16.mxu0 0
        %603 = vmatmul.mubr.bf16.gmra.mxu0 %v368
        %v604 = vpop.f32.mrf.mxu0
        %v605 = vadd.f32 0.0, %v604
        %v606 = vpop.f32.mrf.mxu0
        %v607 = vadd.f32 0.0, %v606
        %v608 = vpop.f32.mrf.mxu0
        %v609 = vpop.f32.mrf.mxu0
        %610 = vdwg.mxu0
        %v611 = vadd.f32 %v363, %v564
        %v612 = vadd.f32 %v364, %v566
        %v613 = vadd.f32 %v365, %v605
        %v614 = vadd.f32 %v366, %v607
        %v615 = vmul.f32 %v611, 0.5
        %v616 = vtanh.pop %v615
        %v617 = vadd.f32 %v616, 1.0
        %v618 = vmul.f32 %v617, 0.5
        %v619 = vmul.f32 %v612, 0.5
        %v620 = vtanh.pop %v619
        %v621 = vadd.f32 %v620, 1.0
        %v622 = vmul.f32 %v621, 0.5
        %v623 = vtanh.pop %v613
        %v624 = vmul.f32 %v614, 0.5
        %v625 = vtanh.pop %v624
        %v626 = vadd.f32 %v625, 1.0
        %v627 = vmul.f32 %v626, 0.5
        %v628 = vld [vmem:[#allocation3] sm:$0xff]
        %v629 = vmul.f32 %v622, %v628
        %v630 = vmul.f32 %v618, %v623
        %v631 = vadd.f32 %v629, %v630
        %v632 = vtanh.pop %v631
        %v633 = vmul.f32 %v627, %v632
        %634 = vst [vmem:[#allocation3] sm:$0xff] %v631
        %635 = vst [vmem:[#allocation2] sm:$0xff] %v633
        %v636 = vpack.c.bf16 %v633, %v633
        %s637 = smul.addr %s332, 4
        %s638 = scalar_lea.vmem %s282, %s637 [#allocation10]
        %639 = vst [vmem:[%s638] sm:$0xf] %v636
        %s640 = smul.u32 %s27, 2
        %s641 = ssub.s32 1, %s640
        %s642 = sadd.s32 %s332, %s641
        %s643 = smul.u32 %s642, 4
        %s644 = smul.addr %s643, 4
        %s645 = scalar_lea.vmem %s242, %s644 [#allocation4]
        %v646 = vld [vmem:[%s645] sm:$0xff]
        %v647 = vld [vmem:[%s645 + $0x8] sm:$0xff]
        %v648 = vunpack.c.l.bf16 %v646
        %v649 = vunpack.c.h.bf16 %v646
        %v650 = vunpack.c.l.bf16 %v647
        %v651 = vunpack.c.h.bf16 %v647
        %v652 = vadd.f32 %v648, %v346
        %v653 = vadd.f32 %v649, %v350
        %v654 = vadd.f32 %v650, %v354
        %v655 = vadd.f32 %v651, %v358
        %v656 = vld [vmem:[#allocation2] sm:$0xff]
        %v657 = vpack.c.bf16 %v656, %v656
        %658 = vmatprep.subr.bf16.mxu0 %v494
        %659 = vmatpush1.bf16.msra.mxu0 %v493
        %660 = vmatprep.subr.bf16.mxu0 %v490
        %661 = vmatpush1.bf16.msra.mxu0 %v489
        %662 = vmatprep.subr.bf16.mxu0 %v486
        %663 = vmatpush1.bf16.msra.mxu0 %v485
        %664 = vmatprep.subr.bf16.mxu0 %v482
        %665 = vmatpush1.bf16.msra.mxu0 %v481
        %666 = vmatprep.subr.bf16.mxu0 %v478
        %667 = vmatpush1.bf16.msra.mxu0 %v477
        %668 = vmatprep.subr.bf16.mxu0 %v474
        %669 = vmatpush1.bf16.msra.mxu0 %v473
        %670 = vmatprep.subr.bf16.mxu0 %v470
        %671 = vmatpush1.bf16.msra.mxu0 %v469
        %672 = vmatprep.subr.bf16.mxu0 %v466
        %673 = vmatpush1.bf16.msra.mxu0 %v465
        %674 = vmatprep.subr.bf16.mxu0 0
        %675 = vmatpush2.bf16.msra.mxu0 0
        %676 = vmatprep.subr.bf16.mxu0 0
        %677 = vmatpush2.bf16.msra.mxu0 0
        %678 = vmatprep.subr.bf16.mxu0 0
        %679 = vmatpush2.bf16.msra.mxu0 0
        %680 = vmatprep.subr.bf16.mxu0 0
        %681 = vmatpush2.bf16.msra.mxu0 0
        %682 = vmatprep.subr.bf16.mxu0 0
        %683 = vmatpush2.bf16.msra.mxu0 0
        %684 = vmatprep.subr.bf16.mxu0 0
        %685 = vmatpush2.bf16.msra.mxu0 0
        %686 = vmatprep.subr.bf16.mxu0 0
        %687 = vmatpush2.bf16.msra.mxu0 0
        %688 = vmatprep.subr.bf16.mxu0 0
        %689 = vmatpush2.bf16.msra.mxu0 0
        %690 = vmatprep.mubr.bf16.mxu0 0
        %691 = vmatmul.mubr.bf16.gmra.mxu0 %v657
        %v692 = vpop.f32.mrf.mxu0
        %v693 = vadd.f32 0.0, %v692
        %v694 = vpop.f32.mrf.mxu0
        %v695 = vadd.f32 0.0, %v694
        %v696 = vpop.f32.mrf.mxu0
        %v697 = vpop.f32.mrf.mxu0
        %698 = vdwg.mxu0
        %699 = vmatprep.subr.bf16.mxu0 %v496
        %700 = vmatpush1.bf16.msra.mxu0 %v495
        %701 = vmatprep.subr.bf16.mxu0 %v492
        %702 = vmatpush1.bf16.msra.mxu0 %v491
        %703 = vmatprep.subr.bf16.mxu0 %v488
        %704 = vmatpush1.bf16.msra.mxu0 %v487
        %705 = vmatprep.subr.bf16.mxu0 %v484
        %706 = vmatpush1.bf16.msra.mxu0 %v483
        %707 = vmatprep.subr.bf16.mxu0 %v480
        %708 = vmatpush1.bf16.msra.mxu0 %v479
        %709 = vmatprep.subr.bf16.mxu0 %v476
        %710 = vmatpush1.bf16.msra.mxu0 %v475
        %711 = vmatprep.subr.bf16.mxu0 %v472
        %712 = vmatpush1.bf16.msra.mxu0 %v471
        %713 = vmatprep.subr.bf16.mxu0 %v468
        %714 = vmatpush1.bf16.msra.mxu0 %v467
        %715 = vmatprep.subr.bf16.mxu0 0
        %716 = vmatpush2.bf16.msra.mxu0 0
        %717 = vmatprep.subr.bf16.mxu0 0
        %718 = vmatpush2.bf16.msra.mxu0 0
        %719 = vmatprep.subr.bf16.mxu0 0
        %720 = vmatpush2.bf16.msra.mxu0 0
        %721 = vmatprep.subr.bf16.mxu0 0
        %722 = vmatpush2.bf16.msra.mxu0 0
        %723 = vmatprep.subr.bf16.mxu0 0
        %724 = vmatpush2.bf16.msra.mxu0 0
        %725 = vmatprep.subr.bf16.mxu0 0
        %726 = vmatpush2.bf16.msra.mxu0 0
        %727 = vmatprep.subr.bf16.mxu0 0
        %728 = vmatpush2.bf16.msra.mxu0 0
        %729 = vmatprep.subr.bf16.mxu0 0
        %730 = vmatpush2.bf16.msra.mxu0 0
        %731 = vmatprep.mubr.bf16.mxu0 0
        %732 = vmatmul.mubr.bf16.gmra.mxu0 %v657
        %v733 = vpop.f32.mrf.mxu0
        %v734 = vadd.f32 0.0, %v733
        %v735 = vpop.f32.mrf.mxu0
        %v736 = vadd.f32 0.0, %v735
        %v737 = vpop.f32.mrf.mxu0
        %v738 = vpop.f32.mrf.mxu0
        %739 = vdwg.mxu0
        %v740 = vadd.f32 %v652, %v693
        %v741 = vadd.f32 %v653, %v695
        %v742 = vadd.f32 %v654, %v734
        %v743 = vadd.f32 %v655, %v736
        %v744 = vmul.f32 %v740, 0.5
        %v745 = vtanh.pop %v744
        %v746 = vadd.f32 %v745, 1.0
        %v747 = vmul.f32 %v746, 0.5
        %v748 = vmul.f32 %v741, 0.5
        %v749 = vtanh.pop %v748
        %v750 = vadd.f32 %v749, 1.0
        %v751 = vmul.f32 %v750, 0.5
        %v752 = vtanh.pop %v742
        %v753 = vmul.f32 %v743, 0.5
        %v754 = vtanh.pop %v753
        %v755 = vadd.f32 %v754, 1.0
        %v756 = vmul.f32 %v755, 0.5
        %v757 = vld [vmem:[#allocation3] sm:$0xff]
        %v758 = vmul.f32 %v751, %v757
        %v759 = vmul.f32 %v747, %v752
        %v760 = vadd.f32 %v758, %v759
        %v761 = vtanh.pop %v760
        %v762 = vmul.f32 %v756, %v761
        %763 = vst [vmem:[#allocation3] sm:$0xff] %v760
        %764 = vst [vmem:[#allocation2] sm:$0xff] %v762
        %v765 = vpack.c.bf16 %v762, %v762
        %s766 = smul.addr %s642, 4
        %s767 = scalar_lea.vmem %s282, %s766 [#allocation10]
        %768 = vst [vmem:[%s767] sm:$0xf] %v765
        %s769 = smul.u32 %s641, 2
        %s770 = sadd.s32 %s332, %s769
        %s771 = smul.u32 %s770, 4
        %s772 = smul.addr %s771, 4
        %s773 = scalar_lea.vmem %s242, %s772 [#allocation4]
        %v774 = vld [vmem:[%s773] sm:$0xff]
        %v775 = vld [vmem:[%s773 + $0x8] sm:$0xff]
        %v776 = vunpack.c.l.bf16 %v774
        %v777 = vunpack.c.h.bf16 %v774
        %v778 = vunpack.c.l.bf16 %v775
        %v779 = vunpack.c.h.bf16 %v775
        %v780 = vadd.f32 %v776, %v346
        %v781 = vadd.f32 %v777, %v350
        %v782 = vadd.f32 %v778, %v354
        %v783 = vadd.f32 %v779, %v358
        %v784 = vld [vmem:[#allocation2] sm:$0xff]
        %v785 = vpack.c.bf16 %v784, %v784
        %786 = vmatprep.subr.bf16.mxu0 %v494
        %787 = vmatpush1.bf16.msra.mxu0 %v493
        %788 = vmatprep.subr.bf16.mxu0 %v490
        %789 = vmatpush1.bf16.msra.mxu0 %v489
        %790 = vmatprep.subr.bf16.mxu0 %v486
        %791 = vmatpush1.bf16.msra.mxu0 %v485
        %792 = vmatprep.subr.bf16.mxu0 %v482
        %793 = vmatpush1.bf16.msra.mxu0 %v481
        %794 = vmatprep.subr.bf16.mxu0 %v478
        %795 = vmatpush1.bf16.msra.mxu0 %v477
        %796 = vmatprep.subr.bf16.mxu0 %v474
        %797 = vmatpush1.bf16.msra.mxu0 %v473
        %798 = vmatprep.subr.bf16.mxu0 %v470
        %799 = vmatpush1.bf16.msra.mxu0 %v469
        %800 = vmatprep.subr.bf16.mxu0 %v466
        %801 = vmatpush1.bf16.msra.mxu0 %v465
        %802 = vmatprep.subr.bf16.mxu0 0
        %803 = vmatpush2.bf16.msra.mxu0 0
        %804 = vmatprep.subr.bf16.mxu0 0
        %805 = vmatpush2.bf16.msra.mxu0 0
        %806 = vmatprep.subr.bf16.mxu0 0
        %807 = vmatpush2.bf16.msra.mxu0 0
        %808 = vmatprep.subr.bf16.mxu0 0
        %809 = vmatpush2.bf16.msra.mxu0 0
        %810 = vmatprep.subr.bf16.mxu0 0
        %811 = vmatpush2.bf16.msra.mxu0 0
        %812 = vmatprep.subr.bf16.mxu0 0
        %813 = vmatpush2.bf16.msra.mxu0 0
        %814 = vmatprep.subr.bf16.mxu0 0
        %815 = vmatpush2.bf16.msra.mxu0 0
        %816 = vmatprep.subr.bf16.mxu0 0
        %817 = vmatpush2.bf16.msra.mxu0 0
        %818 = vmatprep.mubr.bf16.mxu0 0
        %819 = vmatmul.mubr.bf16.gmra.mxu0 %v785
        %v820 = vpop.f32.mrf.mxu0
        %v821 = vadd.f32 0.0, %v820
        %v822 = vpop.f32.mrf.mxu0
        %v823 = vadd.f32 0.0, %v822
        %v824 = vpop.f32.mrf.mxu0
        %v825 = vpop.f32.mrf.mxu0
        %826 = vdwg.mxu0
        %827 = vmatprep.subr.bf16.mxu0 %v496
        %828 = vmatpush1.bf16.msra.mxu0 %v495
        %829 = vmatprep.subr.bf16.mxu0 %v492
        %830 = vmatpush1.bf16.msra.mxu0 %v491
        %831 = vmatprep.subr.bf16.mxu0 %v488
        %832 = vmatpush1.bf16.msra.mxu0 %v487
        %833 = vmatprep.subr.bf16.mxu0 %v484
        %834 = vmatpush1.bf16.msra.mxu0 %v483
        %835 = vmatprep.subr.bf16.mxu0 %v480
        %836 = vmatpush1.bf16.msra.mxu0 %v479
        %837 = vmatprep.subr.bf16.mxu0 %v476
        %838 = vmatpush1.bf16.msra.mxu0 %v475
        %839 = vmatprep.subr.bf16.mxu0 %v472
        %840 = vmatpush1.bf16.msra.mxu0 %v471
        %841 = vmatprep.subr.bf16.mxu0 %v468
        %842 = vmatpush1.bf16.msra.mxu0 %v467
        %843 = vmatprep.subr.bf16.mxu0 0
        %844 = vmatpush2.bf16.msra.mxu0 0
        %845 = vmatprep.subr.bf16.mxu0 0
        %846 = vmatpush2.bf16.msra.mxu0 0
        %847 = vmatprep.subr.bf16.mxu0 0
        %848 = vmatpush2.bf16.msra.mxu0 0
        %849 = vmatprep.subr.bf16.mxu0 0
        %850 = vmatpush2.bf16.msra.mxu0 0
        %851 = vmatprep.subr.bf16.mxu0 0
        %852 = vmatpush2.bf16.msra.mxu0 0
        %853 = vmatprep.subr.bf16.mxu0 0
        %854 = vmatpush2.bf16.msra.mxu0 0
        %855 = vmatprep.subr.bf16.mxu0 0
        %856 = vmatpush2.bf16.msra.mxu0 0
        %857 = vmatprep.subr.bf16.mxu0 0
        %858 = vmatpush2.bf16.msra.mxu0 0
        %859 = vmatprep.mubr.bf16.mxu0 0
        %860 = vmatmul.mubr.bf16.gmra.mxu0 %v785
        %v861 = vpop.f32.mrf.mxu0
        %v862 = vadd.f32 0.0, %v861
        %v863 = vpop.f32.mrf.mxu0
        %v864 = vadd.f32 0.0, %v863
        %v865 = vpop.f32.mrf.mxu0
        %v866 = vpop.f32.mrf.mxu0
        %867 = vdwg.mxu0
        %v868 = vadd.f32 %v780, %v821
        %v869 = vadd.f32 %v781, %v823
        %v870 = vadd.f32 %v782, %v862
        %v871 = vadd.f32 %v783, %v864
        %v872 = vmul.f32 %v868, 0.5
        %v873 = vtanh.pop %v872
        %v874 = vadd.f32 %v873, 1.0
        %v875 = vmul.f32 %v874, 0.5
        %v876 = vmul.f32 %v869, 0.5
        %v877 = vtanh.pop %v876
        %v878 = vadd.f32 %v877, 1.0
        %v879 = vmul.f32 %v878, 0.5
        %v880 = vtanh.pop %v870
        %v881 = vmul.f32 %v871, 0.5
        %v882 = vtanh.pop %v881
        %v883 = vadd.f32 %v882, 1.0
        %v884 = vmul.f32 %v883, 0.5
        %v885 = vld [vmem:[#allocation3] sm:$0xff]
        %v886 = vmul.f32 %v879, %v885
        %v887 = vmul.f32 %v875, %v880
        %v888 = vadd.f32 %v886, %v887
        %v889 = vtanh.pop %v888
        %v890 = vmul.f32 %v884, %v889
        %891 = vst [vmem:[#allocation3] sm:$0xff] %v888
        %892 = vst [vmem:[#allocation2] sm:$0xff] %v890
        %v893 = vpack.c.bf16 %v890, %v890
        %s894 = smul.addr %s770, 4
        %s895 = scalar_lea.vmem %s282, %s894 [#allocation10]
        %896 = vst [vmem:[%s895] sm:$0xf] %v893
        %s897 = smul.u32 %s641, 3
        %s898 = sadd.s32 %s332, %s897
        %s899 = smul.u32 %s898, 4
        %s900 = smul.addr %s899, 4
        %s901 = scalar_lea.vmem %s242, %s900 [#allocation4]
        %v902 = vld [vmem:[%s901] sm:$0xff]
        %v903 = vld [vmem:[%s901 + $0x8] sm:$0xff]
        %v904 = vunpack.c.l.bf16 %v902
        %v905 = vunpack.c.h.bf16 %v902
        %v906 = vunpack.c.l.bf16 %v903
        %v907 = vunpack.c.h.bf16 %v903
        %v908 = vadd.f32 %v904, %v346
        %v909 = vadd.f32 %v905, %v350
        %v910 = vadd.f32 %v906, %v354
        %v911 = vadd.f32 %v907, %v358
        %v912 = vld [vmem:[#allocation2] sm:$0xff]
        %v913 = vpack.c.bf16 %v912, %v912
        %914 = vmatprep.subr.bf16.mxu0 %v494
        %915 = vmatpush1.bf16.msra.mxu0 %v493
        %916 = vmatprep.subr.bf16.mxu0 %v490
        %917 = vmatpush1.bf16.msra.mxu0 %v489
        %918 = vmatprep.subr.bf16.mxu0 %v486
        %919 = vmatpush1.bf16.msra.mxu0 %v485
        %920 = vmatprep.subr.bf16.mxu0 %v482
        %921 = vmatpush1.bf16.msra.mxu0 %v481
        %922 = vmatprep.subr.bf16.mxu0 %v478
        %923 = vmatpush1.bf16.msra.mxu0 %v477
        %924 = vmatprep.subr.bf16.mxu0 %v474
        %925 = vmatpush1.bf16.msra.mxu0 %v473
        %926 = vmatprep.subr.bf16.mxu0 %v470
        %927 = vmatpush1.bf16.msra.mxu0 %v469
        %928 = vmatprep.subr.bf16.mxu0 %v466
        %929 = vmatpush1.bf16.msra.mxu0 %v465
        %930 = vmatprep.subr.bf16.mxu0 0
        %931 = vmatpush2.bf16.msra.mxu0 0
        %932 = vmatprep.subr.bf16.mxu0 0
        %933 = vmatpush2.bf16.msra.mxu0 0
        %934 = vmatprep.subr.bf16.mxu0 0
        %935 = vmatpush2.bf16.msra.mxu0 0
        %936 = vmatprep.subr.bf16.mxu0 0
        %937 = vmatpush2.bf16.msra.mxu0 0
        %938 = vmatprep.subr.bf16.mxu0 0
        %939 = vmatpush2.bf16.msra.mxu0 0
        %940 = vmatprep.subr.bf16.mxu0 0
        %941 = vmatpush2.bf16.msra.mxu0 0
        %942 = vmatprep.subr.bf16.mxu0 0
        %943 = vmatpush2.bf16.msra.mxu0 0
        %944 = vmatprep.subr.bf16.mxu0 0
        %945 = vmatpush2.bf16.msra.mxu0 0
        %946 = vmatprep.mubr.bf16.mxu0 0
        %947 = vmatmul.mubr.bf16.gmra.mxu0 %v913
        %v948 = vpop.f32.mrf.mxu0
        %v949 = vadd.f32 0.0, %v948
        %v950 = vpop.f32.mrf.mxu0
        %v951 = vadd.f32 0.0, %v950
        %v952 = vpop.f32.mrf.mxu0
        %v953 = vpop.f32.mrf.mxu0
        %954 = vdwg.mxu0
        %955 = vmatprep.subr.bf16.mxu0 %v496
        %956 = vmatpush1.bf16.msra.mxu0 %v495
        %957 = vmatprep.subr.bf16.mxu0 %v492
        %958 = vmatpush1.bf16.msra.mxu0 %v491
        %959 = vmatprep.subr.bf16.mxu0 %v488
        %960 = vmatpush1.bf16.msra.mxu0 %v487
        %961 = vmatprep.subr.bf16.mxu0 %v484
        %962 = vmatpush1.bf16.msra.mxu0 %v483
        %963 = vmatprep.subr.bf16.mxu0 %v480
        %964 = vmatpush1.bf16.msra.mxu0 %v479
        %965 = vmatprep.subr.bf16.mxu0 %v476
        %966 = vmatpush1.bf16.msra.mxu0 %v475
        %967 = vmatprep.subr.bf16.mxu0 %v472
        %968 = vmatpush1.bf16.msra.mxu0 %v471
        %969 = vmatprep.subr.bf16.mxu0 %v468
        %970 = vmatpush1.bf16.msra.mxu0 %v467
        %971 = vmatprep.subr.bf16.mxu0 0
        %972 = vmatpush2.bf16.msra.mxu0 0
        %973 = vmatprep.subr.bf16.mxu0 0
        %974 = vmatpush2.bf16.msra.mxu0 0
        %975 = vmatprep.subr.bf16.mxu0 0
        %976 = vmatpush2.bf16.msra.mxu0 0
        %977 = vmatprep.subr.bf16.mxu0 0
        %978 = vmatpush2.bf16.msra.mxu0 0
        %979 = vmatprep.subr.bf16.mxu0 0
        %980 = vmatpush2.bf16.msra.mxu0 0
        %981 = vmatprep.subr.bf16.mxu0 0
        %982 = vmatpush2.bf16.msra.mxu0 0
        %983 = vmatprep.subr.bf16.mxu0 0
        %984 = vmatpush2.bf16.msra.mxu0 0
        %985 = vmatprep.subr.bf16.mxu0 0
        %986 = vmatpush2.bf16.msra.mxu0 0
        %987 = vmatprep.mubr.bf16.mxu0 0
        %988 = vmatmul.mubr.bf16.gmra.mxu0 %v913
        %v989 = vpop.f32.mrf.mxu0
        %v990 = vadd.f32 0.0, %v989
        %v991 = vpop.f32.mrf.mxu0
        %v992 = vadd.f32 0.0, %v991
        %v993 = vpop.f32.mrf.mxu0
        %v994 = vpop.f32.mrf.mxu0
        %995 = vdwg.mxu0
        %v996 = vadd.f32 %v908, %v949
        %v997 = vadd.f32 %v909, %v951
        %v998 = vadd.f32 %v910, %v990
        %v999 = vadd.f32 %v911, %v992
        %v1000 = vmul.f32 %v996, 0.5
        %v1001 = vtanh.pop %v1000
        %v1002 = vadd.f32 %v1001, 1.0
        %v1003 = vmul.f32 %v1002, 0.5
        %v1004 = vmul.f32 %v997, 0.5
        %v1005 = vtanh.pop %v1004
        %v1006 = vadd.f32 %v1005, 1.0
        %v1007 = vmul.f32 %v1006, 0.5
        %v1008 = vtanh.pop %v998
        %v1009 = vmul.f32 %v999, 0.5
        %v1010 = vtanh.pop %v1009
        %v1011 = vadd.f32 %v1010, 1.0
        %v1012 = vmul.f32 %v1011, 0.5
        %v1013 = vld [vmem:[#allocation3] sm:$0xff]
        %v1014 = vmul.f32 %v1007, %v1013
        %v1015 = vmul.f32 %v1003, %v1008
        %v1016 = vadd.f32 %v1014, %v1015
        %v1017 = vtanh.pop %v1016
        %v1018 = vmul.f32 %v1012, %v1017
        %1019 = vst [vmem:[#allocation3] sm:$0xff] %v1016
        %1020 = vst [vmem:[#allocation2] sm:$0xff] %v1018
        %v1021 = vpack.c.bf16 %v1018, %v1018
        %s1022 = smul.addr %s898, 4
        %s1023 = scalar_lea.vmem %s282, %s1022 [#allocation10]
        %1024 = vst [vmem:[%s1023] sm:$0xf] %v1021
        %s1025 = smul.u32 %s641, 4
        %s1026 = sadd.s32 %s332, %s1025
        %s1027 = smul.u32 %s1026, 4
        %s1028 = smul.addr %s1027, 4
        %s1029 = scalar_lea.vmem %s242, %s1028 [#allocation4]
        %v1030 = vld [vmem:[%s1029] sm:$0xff]
        %v1031 = vld [vmem:[%s1029 + $0x8] sm:$0xff]
        %v1032 = vunpack.c.l.bf16 %v1030
        %v1033 = vunpack.c.h.bf16 %v1030
        %v1034 = vunpack.c.l.bf16 %v1031
        %v1035 = vunpack.c.h.bf16 %v1031
        %v1036 = vadd.f32 %v1032, %v346
        %v1037 = vadd.f32 %v1033, %v350
        %v1038 = vadd.f32 %v1034, %v354
        %v1039 = vadd.f32 %v1035, %v358
        %v1040 = vld [vmem:[#allocation2] sm:$0xff]
        %v1041 = vpack.c.bf16 %v1040, %v1040
        %1042 = vmatprep.subr.bf16.mxu0 %v494
        %1043 = vmatpush1.bf16.msra.mxu0 %v493
        %1044 = vmatprep.subr.bf16.mxu0 %v490
        %1045 = vmatpush1.bf16.msra.mxu0 %v489
        %1046 = vmatprep.subr.bf16.mxu0 %v486
        %1047 = vmatpush1.bf16.msra.mxu0 %v485
        %1048 = vmatprep.subr.bf16.mxu0 %v482
        %1049 = vmatpush1.bf16.msra.mxu0 %v481
        %1050 = vmatprep.subr.bf16.mxu0 %v478
        %1051 = vmatpush1.bf16.msra.mxu0 %v477
        %1052 = vmatprep.subr.bf16.mxu0 %v474
        %1053 = vmatpush1.bf16.msra.mxu0 %v473
        %1054 = vmatprep.subr.bf16.mxu0 %v470
        %1055 = vmatpush1.bf16.msra.mxu0 %v469
        %1056 = vmatprep.subr.bf16.mxu0 %v466
        %1057 = vmatpush1.bf16.msra.mxu0 %v465
        %1058 = vmatprep.subr.bf16.mxu0 0
        %1059 = vmatpush2.bf16.msra.mxu0 0
        %1060 = vmatprep.subr.bf16.mxu0 0
        %1061 = vmatpush2.bf16.msra.mxu0 0
        %1062 = vmatprep.subr.bf16.mxu0 0
        %1063 = vmatpush2.bf16.msra.mxu0 0
        %1064 = vmatprep.subr.bf16.mxu0 0
        %1065 = vmatpush2.bf16.msra.mxu0 0
        %1066 = vmatprep.subr.bf16.mxu0 0
        %1067 = vmatpush2.bf16.msra.mxu0 0
        %1068 = vmatprep.subr.bf16.mxu0 0
        %1069 = vmatpush2.bf16.msra.mxu0 0
        %1070 = vmatprep.subr.bf16.mxu0 0
        %1071 = vmatpush2.bf16.msra.mxu0 0
        %1072 = vmatprep.subr.bf16.mxu0 0
        %1073 = vmatpush2.bf16.msra.mxu0 0
        %1074 = vmatprep.mubr.bf16.mxu0 0
        %1075 = vmatmul.mubr.bf16.gmra.mxu0 %v1041
        %v1076 = vpop.f32.mrf.mxu0
        %v1077 = vadd.f32 0.0, %v1076
        %v1078 = vpop.f32.mrf.mxu0
        %v1079 = vadd.f32 0.0, %v1078
        %v1080 = vpop.f32.mrf.mxu0
        %v1081 = vpop.f32.mrf.mxu0
        %1082 = vdwg.mxu0
        %1083 = vmatprep.subr.bf16.mxu0 %v496
        %1084 = vmatpush1.bf16.msra.mxu0 %v495
        %1085 = vmatprep.subr.bf16.mxu0 %v492
        %1086 = vmatpush1.bf16.msra.mxu0 %v491
        %1087 = vmatprep.subr.bf16.mxu0 %v488
        %1088 = vmatpush1.bf16.msra.mxu0 %v487
        %1089 = vmatprep.subr.bf16.mxu0 %v484
        %1090 = vmatpush1.bf16.msra.mxu0 %v483
        %1091 = vmatprep.subr.bf16.mxu0 %v480
        %1092 = vmatpush1.bf16.msra.mxu0 %v479
        %1093 = vmatprep.subr.bf16.mxu0 %v476
        %1094 = vmatpush1.bf16.msra.mxu0 %v475
        %1095 = vmatprep.subr.bf16.mxu0 %v472
        %1096 = vmatpush1.bf16.msra.mxu0 %v471
        %1097 = vmatprep.subr.bf16.mxu0 %v468
        %1098 = vmatpush1.bf16.msra.mxu0 %v467
        %1099 = vmatprep.subr.bf16.mxu0 0
        %1100 = vmatpush2.bf16.msra.mxu0 0
        %1101 = vmatprep.subr.bf16.mxu0 0
        %1102 = vmatpush2.bf16.msra.mxu0 0
        %1103 = vmatprep.subr.bf16.mxu0 0
        %1104 = vmatpush2.bf16.msra.mxu0 0
        %1105 = vmatprep.subr.bf16.mxu0 0
        %1106 = vmatpush2.bf16.msra.mxu0 0
        %1107 = vmatprep.subr.bf16.mxu0 0
        %1108 = vmatpush2.bf16.msra.mxu0 0
        %1109 = vmatprep.subr.bf16.mxu0 0
        %1110 = vmatpush2.bf16.msra.mxu0 0
        %1111 = vmatprep.subr.bf16.mxu0 0
        %1112 = vmatpush2.bf16.msra.mxu0 0
        %1113 = vmatprep.subr.bf16.mxu0 0
        %1114 = vmatpush2.bf16.msra.mxu0 0
        %1115 = vmatprep.mubr.bf16.mxu0 0
        %1116 = vmatmul.mubr.bf16.gmra.mxu0 %v1041
        %v1117 = vpop.f32.mrf.mxu0
        %v1118 = vadd.f32 0.0, %v1117
        %v1119 = vpop.f32.mrf.mxu0
        %v1120 = vadd.f32 0.0, %v1119
        %v1121 = vpop.f32.mrf.mxu0
        %v1122 = vpop.f32.mrf.mxu0
        %1123 = vdwg.mxu0
        %v1124 = vadd.f32 %v1036, %v1077
        %v1125 = vadd.f32 %v1037, %v1079
        %v1126 = vadd.f32 %v1038, %v1118
        %v1127 = vadd.f32 %v1039, %v1120
        %v1128 = vmul.f32 %v1124, 0.5
        %v1129 = vtanh.pop %v1128
        %v1130 = vadd.f32 %v1129, 1.0
        %v1131 = vmul.f32 %v1130, 0.5
        %v1132 = vmul.f32 %v1125, 0.5
        %v1133 = vtanh.pop %v1132
        %v1134 = vadd.f32 %v1133, 1.0
        %v1135 = vmul.f32 %v1134, 0.5
        %v1136 = vtanh.pop %v1126
        %v1137 = vmul.f32 %v1127, 0.5
        %v1138 = vtanh.pop %v1137
        %v1139 = vadd.f32 %v1138, 1.0
        %v1140 = vmul.f32 %v1139, 0.5
        %v1141 = vld [vmem:[#allocation3] sm:$0xff]
        %v1142 = vmul.f32 %v1135, %v1141
        %v1143 = vmul.f32 %v1131, %v1136
        %v1144 = vadd.f32 %v1142, %v1143
        %v1145 = vtanh.pop %v1144
        %v1146 = vmul.f32 %v1140, %v1145
        %1147 = vst [vmem:[#allocation3] sm:$0xff] %v1144
        %1148 = vst [vmem:[#allocation2] sm:$0xff] %v1146
        %v1149 = vpack.c.bf16 %v1146, %v1146
        %s1150 = smul.addr %s1026, 4
        %s1151 = scalar_lea.vmem %s282, %s1150 [#allocation10]
        %1152 = vst [vmem:[%s1151] sm:$0xf] %v1149
        %s1153 = smul.u32 %s641, 5
        %s1154 = sadd.s32 %s332, %s1153
        %s1155 = smul.u32 %s1154, 4
        %s1156 = smul.addr %s1155, 4
        %s1157 = scalar_lea.vmem %s242, %s1156 [#allocation4]
        %v1158 = vld [vmem:[%s1157] sm:$0xff]
        %v1159 = vld [vmem:[%s1157 + $0x8] sm:$0xff]
        %v1160 = vunpack.c.l.bf16 %v1158
        %v1161 = vunpack.c.h.bf16 %v1158
        %v1162 = vunpack.c.l.bf16 %v1159
        %v1163 = vunpack.c.h.bf16 %v1159
        %v1164 = vadd.f32 %v1160, %v346
        %v1165 = vadd.f32 %v1161, %v350
        %v1166 = vadd.f32 %v1162, %v354
        %v1167 = vadd.f32 %v1163, %v358
        %v1168 = vld [vmem:[#allocation2] sm:$0xff]
        %v1169 = vpack.c.bf16 %v1168, %v1168
        %1170 = vmatprep.subr.bf16.mxu0 %v494
        %1171 = vmatpush1.bf16.msra.mxu0 %v493
        %1172 = vmatprep.subr.bf16.mxu0 %v490
        %1173 = vmatpush1.bf16.msra.mxu0 %v489
        %1174 = vmatprep.subr.bf16.mxu0 %v486
        %1175 = vmatpush1.bf16.msra.mxu0 %v485
        %1176 = vmatprep.subr.bf16.mxu0 %v482
        %1177 = vmatpush1.bf16.msra.mxu0 %v481
        %1178 = vmatprep.subr.bf16.mxu0 %v478
        %1179 = vmatpush1.bf16.msra.mxu0 %v477
        %1180 = vmatprep.subr.bf16.mxu0 %v474
        %1181 = vmatpush1.bf16.msra.mxu0 %v473
        %1182 = vmatprep.subr.bf16.mxu0 %v470
        %1183 = vmatpush1.bf16.msra.mxu0 %v469
        %1184 = vmatprep.subr.bf16.mxu0 %v466
        %1185 = vmatpush1.bf16.msra.mxu0 %v465
        %1186 = vmatprep.subr.bf16.mxu0 0
        %1187 = vmatpush2.bf16.msra.mxu0 0
        %1188 = vmatprep.subr.bf16.mxu0 0
        %1189 = vmatpush2.bf16.msra.mxu0 0
        %1190 = vmatprep.subr.bf16.mxu0 0
        %1191 = vmatpush2.bf16.msra.mxu0 0
        %1192 = vmatprep.subr.bf16.mxu0 0
        %1193 = vmatpush2.bf16.msra.mxu0 0
        %1194 = vmatprep.subr.bf16.mxu0 0
        %1195 = vmatpush2.bf16.msra.mxu0 0
        %1196 = vmatprep.subr.bf16.mxu0 0
        %1197 = vmatpush2.bf16.msra.mxu0 0
        %1198 = vmatprep.subr.bf16.mxu0 0
        %1199 = vmatpush2.bf16.msra.mxu0 0
        %1200 = vmatprep.subr.bf16.mxu0 0
        %1201 = vmatpush2.bf16.msra.mxu0 0
        %1202 = vmatprep.mubr.bf16.mxu0 0
        %1203 = vmatmul.mubr.bf16.gmra.mxu0 %v1169
        %v1204 = vpop.f32.mrf.mxu0
        %v1205 = vadd.f32 0.0, %v1204
        %v1206 = vpop.f32.mrf.mxu0
        %v1207 = vadd.f32 0.0, %v1206
        %v1208 = vpop.f32.mrf.mxu0
        %v1209 = vpop.f32.mrf.mxu0
        %1210 = vdwg.mxu0
        %1211 = vmatprep.subr.bf16.mxu0 %v496
        %1212 = vmatpush1.bf16.msra.mxu0 %v495
        %1213 = vmatprep.subr.bf16.mxu0 %v492
        %1214 = vmatpush1.bf16.msra.mxu0 %v491
        %1215 = vmatprep.subr.bf16.mxu0 %v488
        %1216 = vmatpush1.bf16.msra.mxu0 %v487
        %1217 = vmatprep.subr.bf16.mxu0 %v484
        %1218 = vmatpush1.bf16.msra.mxu0 %v483
        %1219 = vmatprep.subr.bf16.mxu0 %v480
        %1220 = vmatpush1.bf16.msra.mxu0 %v479
        %1221 = vmatprep.subr.bf16.mxu0 %v476
        %1222 = vmatpush1.bf16.msra.mxu0 %v475
        %1223 = vmatprep.subr.bf16.mxu0 %v472
        %1224 = vmatpush1.bf16.msra.mxu0 %v471
        %1225 = vmatprep.subr.bf16.mxu0 %v468
        %1226 = vmatpush1.bf16.msra.mxu0 %v467
        %1227 = vmatprep.subr.bf16.mxu0 0
        %1228 = vmatpush2.bf16.msra.mxu0 0
        %1229 = vmatprep.subr.bf16.mxu0 0
        %1230 = vmatpush2.bf16.msra.mxu0 0
        %1231 = vmatprep.subr.bf16.mxu0 0
        %1232 = vmatpush2.bf16.msra.mxu0 0
        %1233 = vmatprep.subr.bf16.mxu0 0
        %1234 = vmatpush2.bf16.msra.mxu0 0
        %1235 = vmatprep.subr.bf16.mxu0 0
        %1236 = vmatpush2.bf16.msra.mxu0 0
        %1237 = vmatprep.subr.bf16.mxu0 0
        %1238 = vmatpush2.bf16.msra.mxu0 0
        %1239 = vmatprep.subr.bf16.mxu0 0
        %1240 = vmatpush2.bf16.msra.mxu0 0
        %1241 = vmatprep.subr.bf16.mxu0 0
        %1242 = vmatpush2.bf16.msra.mxu0 0
        %1243 = vmatprep.mubr.bf16.mxu0 0
        %1244 = vmatmul.mubr.bf16.gmra.mxu0 %v1169
        %v1245 = vpop.f32.mrf.mxu0
        %v1246 = vadd.f32 0.0, %v1245
        %v1247 = vpop.f32.mrf.mxu0
        %v1248 = vadd.f32 0.0, %v1247
        %v1249 = vpop.f32.mrf.mxu0
        %v1250 = vpop.f32.mrf.mxu0
        %1251 = vdwg.mxu0
        %v1252 = vadd.f32 %v1164, %v1205
        %v1253 = vadd.f32 %v1165, %v1207
        %v1254 = vadd.f32 %v1166, %v1246
        %v1255 = vadd.f32 %v1167, %v1248
        %v1256 = vmul.f32 %v1252, 0.5
        %v1257 = vtanh.pop %v1256
        %v1258 = vadd.f32 %v1257, 1.0
        %v1259 = vmul.f32 %v1258, 0.5
        %v1260 = vmul.f32 %v1253, 0.5
        %v1261 = vtanh.pop %v1260
        %v1262 = vadd.f32 %v1261, 1.0
        %v1263 = vmul.f32 %v1262, 0.5
        %v1264 = vtanh.pop %v1254
        %v1265 = vmul.f32 %v1255, 0.5
        %v1266 = vtanh.pop %v1265
        %v1267 = vadd.f32 %v1266, 1.0
        %v1268 = vmul.f32 %v1267, 0.5
        %v1269 = vld [vmem:[#allocation3] sm:$0xff]
        %v1270 = vmul.f32 %v1263, %v1269
        %v1271 = vmul.f32 %v1259, %v1264
        %v1272 = vadd.f32 %v1270, %v1271
        %v1273 = vtanh.pop %v1272
        %v1274 = vmul.f32 %v1268, %v1273
        %1275 = vst [vmem:[#allocation3] sm:$0xff] %v1272
        %1276 = vst [vmem:[#allocation2] sm:$0xff] %v1274
        %v1277 = vpack.c.bf16 %v1274, %v1274
        %s1278 = smul.addr %s1154, 4
        %s1279 = scalar_lea.vmem %s282, %s1278 [#allocation10]
        %1280 = vst [vmem:[%s1279] sm:$0xf] %v1277
        %s1281 = smul.u32 %s641, 6
        %s1282 = sadd.s32 %s332, %s1281
        %s1283 = smul.u32 %s1282, 4
        %s1284 = smul.addr %s1283, 4
        %s1285 = scalar_lea.vmem %s242, %s1284 [#allocation4]
        %v1286 = vld [vmem:[%s1285] sm:$0xff]
        %v1287 = vld [vmem:[%s1285 + $0x8] sm:$0xff]
        %v1288 = vunpack.c.l.bf16 %v1286
        %v1289 = vunpack.c.h.bf16 %v1286
        %v1290 = vunpack.c.l.bf16 %v1287
        %v1291 = vunpack.c.h.bf16 %v1287
        %v1292 = vadd.f32 %v1288, %v346
        %v1293 = vadd.f32 %v1289, %v350
        %v1294 = vadd.f32 %v1290, %v354
        %v1295 = vadd.f32 %v1291, %v358
        %v1296 = vld [vmem:[#allocation2] sm:$0xff]
        %v1297 = vpack.c.bf16 %v1296, %v1296
        %1298 = vmatprep.subr.bf16.mxu0 %v494
        %1299 = vmatpush1.bf16.msra.mxu0 %v493
        %1300 = vmatprep.subr.bf16.mxu0 %v490
        %1301 = vmatpush1.bf16.msra.mxu0 %v489
        %1302 = vmatprep.subr.bf16.mxu0 %v486
        %1303 = vmatpush1.bf16.msra.mxu0 %v485
        %1304 = vmatprep.subr.bf16.mxu0 %v482
        %1305 = vmatpush1.bf16.msra.mxu0 %v481
        %1306 = vmatprep.subr.bf16.mxu0 %v478
        %1307 = vmatpush1.bf16.msra.mxu0 %v477
        %1308 = vmatprep.subr.bf16.mxu0 %v474
        %1309 = vmatpush1.bf16.msra.mxu0 %v473
        %1310 = vmatprep.subr.bf16.mxu0 %v470
        %1311 = vmatpush1.bf16.msra.mxu0 %v469
        %1312 = vmatprep.subr.bf16.mxu0 %v466
        %1313 = vmatpush1.bf16.msra.mxu0 %v465
        %1314 = vmatprep.subr.bf16.mxu0 0
        %1315 = vmatpush2.bf16.msra.mxu0 0
        %1316 = vmatprep.subr.bf16.mxu0 0
        %1317 = vmatpush2.bf16.msra.mxu0 0
        %1318 = vmatprep.subr.bf16.mxu0 0
        %1319 = vmatpush2.bf16.msra.mxu0 0
        %1320 = vmatprep.subr.bf16.mxu0 0
        %1321 = vmatpush2.bf16.msra.mxu0 0
        %1322 = vmatprep.subr.bf16.mxu0 0
        %1323 = vmatpush2.bf16.msra.mxu0 0
        %1324 = vmatprep.subr.bf16.mxu0 0
        %1325 = vmatpush2.bf16.msra.mxu0 0
        %1326 = vmatprep.subr.bf16.mxu0 0
        %1327 = vmatpush2.bf16.msra.mxu0 0
        %1328 = vmatprep.subr.bf16.mxu0 0
        %1329 = vmatpush2.bf16.msra.mxu0 0
        %1330 = vmatprep.mubr.bf16.mxu0 0
        %1331 = vmatmul.mubr.bf16.gmra.mxu0 %v1297
        %v1332 = vpop.f32.mrf.mxu0
        %v1333 = vadd.f32 0.0, %v1332
        %v1334 = vpop.f32.mrf.mxu0
        %v1335 = vadd.f32 0.0, %v1334
        %v1336 = vpop.f32.mrf.mxu0
        %v1337 = vpop.f32.mrf.mxu0
        %1338 = vdwg.mxu0
        %1339 = vmatprep.subr.bf16.mxu0 %v496
        %1340 = vmatpush1.bf16.msra.mxu0 %v495
        %1341 = vmatprep.subr.bf16.mxu0 %v492
        %1342 = vmatpush1.bf16.msra.mxu0 %v491
        %1343 = vmatprep.subr.bf16.mxu0 %v488
        %1344 = vmatpush1.bf16.msra.mxu0 %v487
        %1345 = vmatprep.subr.bf16.mxu0 %v484
        %1346 = vmatpush1.bf16.msra.mxu0 %v483
        %1347 = vmatprep.subr.bf16.mxu0 %v480
        %1348 = vmatpush1.bf16.msra.mxu0 %v479
        %1349 = vmatprep.subr.bf16.mxu0 %v476
        %1350 = vmatpush1.bf16.msra.mxu0 %v475
        %1351 = vmatprep.subr.bf16.mxu0 %v472
        %1352 = vmatpush1.bf16.msra.mxu0 %v471
        %1353 = vmatprep.subr.bf16.mxu0 %v468
        %1354 = vmatpush1.bf16.msra.mxu0 %v467
        %1355 = vmatprep.subr.bf16.mxu0 0
        %1356 = vmatpush2.bf16.msra.mxu0 0
        %1357 = vmatprep.subr.bf16.mxu0 0
        %1358 = vmatpush2.bf16.msra.mxu0 0
        %1359 = vmatprep.subr.bf16.mxu0 0
        %1360 = vmatpush2.bf16.msra.mxu0 0
        %1361 = vmatprep.subr.bf16.mxu0 0
        %1362 = vmatpush2.bf16.msra.mxu0 0
        %1363 = vmatprep.subr.bf16.mxu0 0
        %1364 = vmatpush2.bf16.msra.mxu0 0
        %1365 = vmatprep.subr.bf16.mxu0 0
        %1366 = vmatpush2.bf16.msra.mxu0 0
        %1367 = vmatprep.subr.bf16.mxu0 0
        %1368 = vmatpush2.bf16.msra.mxu0 0
        %1369 = vmatprep.subr.bf16.mxu0 0
        %1370 = vmatpush2.bf16.msra.mxu0 0
        %1371 = vmatprep.mubr.bf16.mxu0 0
        %1372 = vmatmul.mubr.bf16.gmra.mxu0 %v1297
        %v1373 = vpop.f32.mrf.mxu0
        %v1374 = vadd.f32 0.0, %v1373
        %v1375 = vpop.f32.mrf.mxu0
        %v1376 = vadd.f32 0.0, %v1375
        %v1377 = vpop.f32.mrf.mxu0
        %v1378 = vpop.f32.mrf.mxu0
        %1379 = vdwg.mxu0
        %v1380 = vadd.f32 %v1292, %v1333
        %v1381 = vadd.f32 %v1293, %v1335
        %v1382 = vadd.f32 %v1294, %v1374
        %v1383 = vadd.f32 %v1295, %v1376
        %v1384 = vmul.f32 %v1380, 0.5
        %v1385 = vtanh.pop %v1384
        %v1386 = vadd.f32 %v1385, 1.0
        %v1387 = vmul.f32 %v1386, 0.5
        %v1388 = vmul.f32 %v1381, 0.5
        %v1389 = vtanh.pop %v1388
        %v1390 = vadd.f32 %v1389, 1.0
        %v1391 = vmul.f32 %v1390, 0.5
        %v1392 = vtanh.pop %v1382
        %v1393 = vmul.f32 %v1383, 0.5
        %v1394 = vtanh.pop %v1393
        %v1395 = vadd.f32 %v1394, 1.0
        %v1396 = vmul.f32 %v1395, 0.5
        %v1397 = vld [vmem:[#allocation3] sm:$0xff]
        %v1398 = vmul.f32 %v1391, %v1397
        %v1399 = vmul.f32 %v1387, %v1392
        %v1400 = vadd.f32 %v1398, %v1399
        %v1401 = vtanh.pop %v1400
        %v1402 = vmul.f32 %v1396, %v1401
        %1403 = vst [vmem:[#allocation3] sm:$0xff] %v1400
        %1404 = vst [vmem:[#allocation2] sm:$0xff] %v1402
        %v1405 = vpack.c.bf16 %v1402, %v1402
        %s1406 = smul.addr %s1282, 4
        %s1407 = scalar_lea.vmem %s282, %s1406 [#allocation10]
        %1408 = vst [vmem:[%s1407] sm:$0xf] %v1405
        %s1409 = smul.u32 %s641, 7
        %s1410 = sadd.s32 %s332, %s1409
        %s1411 = smul.u32 %s1410, 4
        %s1412 = smul.addr %s1411, 4
        %s1413 = scalar_lea.vmem %s242, %s1412 [#allocation4]
        %v1414 = vld [vmem:[%s1413] sm:$0xff]
        %v1415 = vld [vmem:[%s1413 + $0x8] sm:$0xff]
        %v1416 = vunpack.c.l.bf16 %v1414
        %v1417 = vunpack.c.h.bf16 %v1414
        %v1418 = vunpack.c.l.bf16 %v1415
        %v1419 = vunpack.c.h.bf16 %v1415
        %v1420 = vadd.f32 %v1416, %v346
        %v1421 = vadd.f32 %v1417, %v350
        %v1422 = vadd.f32 %v1418, %v354
        %v1423 = vadd.f32 %v1419, %v358
        %v1424 = vld [vmem:[#allocation2] sm:$0xff]
        %v1425 = vpack.c.bf16 %v1424, %v1424
        %1426 = vmatprep.subr.bf16.mxu0 %v494
        %1427 = vmatpush1.bf16.msra.mxu0 %v493
        %1428 = vmatprep.subr.bf16.mxu0 %v490
        %1429 = vmatpush1.bf16.msra.mxu0 %v489
        %1430 = vmatprep.subr.bf16.mxu0 %v486
        %1431 = vmatpush1.bf16.msra.mxu0 %v485
        %1432 = vmatprep.subr.bf16.mxu0 %v482
        %1433 = vmatpush1.bf16.msra.mxu0 %v481
        %1434 = vmatprep.subr.bf16.mxu0 %v478
        %1435 = vmatpush1.bf16.msra.mxu0 %v477
        %1436 = vmatprep.subr.bf16.mxu0 %v474
        %1437 = vmatpush1.bf16.msra.mxu0 %v473
        %1438 = vmatprep.subr.bf16.mxu0 %v470
        %1439 = vmatpush1.bf16.msra.mxu0 %v469
        %1440 = vmatprep.subr.bf16.mxu0 %v466
        %1441 = vmatpush1.bf16.msra.mxu0 %v465
        %1442 = vmatprep.subr.bf16.mxu0 0
        %1443 = vmatpush2.bf16.msra.mxu0 0
        %1444 = vmatprep.subr.bf16.mxu0 0
        %1445 = vmatpush2.bf16.msra.mxu0 0
        %1446 = vmatprep.subr.bf16.mxu0 0
        %1447 = vmatpush2.bf16.msra.mxu0 0
        %1448 = vmatprep.subr.bf16.mxu0 0
        %1449 = vmatpush2.bf16.msra.mxu0 0
        %1450 = vmatprep.subr.bf16.mxu0 0
        %1451 = vmatpush2.bf16.msra.mxu0 0
        %1452 = vmatprep.subr.bf16.mxu0 0
        %1453 = vmatpush2.bf16.msra.mxu0 0
        %1454 = vmatprep.subr.bf16.mxu0 0
        %1455 = vmatpush2.bf16.msra.mxu0 0
        %1456 = vmatprep.subr.bf16.mxu0 0
        %1457 = vmatpush2.bf16.msra.mxu0 0
        %1458 = vmatprep.mubr.bf16.mxu0 0
        %1459 = vmatmul.mubr.bf16.gmra.mxu0 %v1425
        %v1460 = vpop.f32.mrf.mxu0
        %v1461 = vadd.f32 0.0, %v1460
        %v1462 = vpop.f32.mrf.mxu0
        %v1463 = vadd.f32 0.0, %v1462
        %v1464 = vpop.f32.mrf.mxu0
        %v1465 = vpop.f32.mrf.mxu0
        %1466 = vdwg.mxu0
        %1467 = vmatprep.subr.bf16.mxu0 %v496
        %1468 = vmatpush1.bf16.msra.mxu0 %v495
        %1469 = vmatprep.subr.bf16.mxu0 %v492
        %1470 = vmatpush1.bf16.msra.mxu0 %v491
        %1471 = vmatprep.subr.bf16.mxu0 %v488
        %1472 = vmatpush1.bf16.msra.mxu0 %v487
        %1473 = vmatprep.subr.bf16.mxu0 %v484
        %1474 = vmatpush1.bf16.msra.mxu0 %v483
        %1475 = vmatprep.subr.bf16.mxu0 %v480
        %1476 = vmatpush1.bf16.msra.mxu0 %v479
        %1477 = vmatprep.subr.bf16.mxu0 %v476
        %1478 = vmatpush1.bf16.msra.mxu0 %v475
        %1479 = vmatprep.subr.bf16.mxu0 %v472
        %1480 = vmatpush1.bf16.msra.mxu0 %v471
        %1481 = vmatprep.subr.bf16.mxu0 %v468
        %1482 = vmatpush1.bf16.msra.mxu0 %v467
        %1483 = vmatprep.subr.bf16.mxu0 0
        %1484 = vmatpush2.bf16.msra.mxu0 0
        %1485 = vmatprep.subr.bf16.mxu0 0
        %1486 = vmatpush2.bf16.msra.mxu0 0
        %1487 = vmatprep.subr.bf16.mxu0 0
        %1488 = vmatpush2.bf16.msra.mxu0 0
        %1489 = vmatprep.subr.bf16.mxu0 0
        %1490 = vmatpush2.bf16.msra.mxu0 0
        %1491 = vmatprep.subr.bf16.mxu0 0
        %1492 = vmatpush2.bf16.msra.mxu0 0
        %1493 = vmatprep.subr.bf16.mxu0 0
        %1494 = vmatpush2.bf16.msra.mxu0 0
        %1495 = vmatprep.subr.bf16.mxu0 0
        %1496 = vmatpush2.bf16.msra.mxu0 0
        %1497 = vmatprep.subr.bf16.mxu0 0
        %1498 = vmatpush2.bf16.msra.mxu0 0
        %1499 = vmatprep.mubr.bf16.mxu0 0
        %1500 = vmatmul.mubr.bf16.gmra.mxu0 %v1425
        %v1501 = vpop.f32.mrf.mxu0
        %v1502 = vadd.f32 0.0, %v1501
        %v1503 = vpop.f32.mrf.mxu0
        %v1504 = vadd.f32 0.0, %v1503
        %v1505 = vpop.f32.mrf.mxu0
        %v1506 = vpop.f32.mrf.mxu0
        %1507 = vdwg.mxu0
        %v1508 = vadd.f32 %v1420, %v1461
        %v1509 = vadd.f32 %v1421, %v1463
        %v1510 = vadd.f32 %v1422, %v1502
        %v1511 = vadd.f32 %v1423, %v1504
        %v1512 = vmul.f32 %v1508, 0.5
        %v1513 = vtanh.pop %v1512
        %v1514 = vadd.f32 %v1513, 1.0
        %v1515 = vmul.f32 %v1514, 0.5
        %v1516 = vmul.f32 %v1509, 0.5
        %v1517 = vtanh.pop %v1516
        %v1518 = vadd.f32 %v1517, 1.0
        %v1519 = vmul.f32 %v1518, 0.5
        %v1520 = vtanh.pop %v1510
        %v1521 = vmul.f32 %v1511, 0.5
        %v1522 = vtanh.pop %v1521
        %v1523 = vadd.f32 %v1522, 1.0
        %v1524 = vmul.f32 %v1523, 0.5
        %v1525 = vld [vmem:[#allocation3] sm:$0xff]
        %v1526 = vmul.f32 %v1519, %v1525
        %v1527 = vmul.f32 %v1515, %v1520
        %v1528 = vadd.f32 %v1526, %v1527
        %v1529 = vtanh.pop %v1528
        %v1530 = vmul.f32 %v1524, %v1529
        %1531 = vst [vmem:[#allocation3] sm:$0xff] %v1528
        %1532 = vst [vmem:[#allocation2] sm:$0xff] %v1530
        %v1533 = vpack.c.bf16 %v1530, %v1530
        %s1534 = smul.addr %s1410, 4
        %s1535 = scalar_lea.vmem %s282, %s1534 [#allocation10]
        %1536 = vst [vmem:[%s1535] sm:$0xf] %v1533
        %s1537 = sand.u32 %s137, 1
        %s1538 = scalar_lea.sflag [#allocation6], %s1537
        %s1539 = sand.u32 %s137, 1
        %s1540 = smul.addr %s1539, 32
        %s1541 = scalar_lea.vmem [#allocation10], %s1540
        // Predicated region
        $region49: #{tpu_custom_call.1} parent=31 // pred_check
          %p1542 = pneg %p147
        $region50: #{tpu_custom_call.1} parent=31 // pred_check_branch
          %1544 = sbr.rel (%p1542) target = $region52
        $region51: #{tpu_custom_call.1} parent=31 // pred_region
          %s1545 = smul.u32 %s27, 2
          %s1546 = ssub.s32 1, %s1545
          %s1547 = smul.u32 %s1546, %s28
          %s1548 = smul.u32 8, %s1547
          %s1550 = ssub.s32 512, 512
          %1551 = vsyncadd %s1538, %s1550
          %s1552 = smul.addr %s1548, 2
          %s1553 = sadd.s32 %s27, %s1552
          %s1554 = smul.addr %s1553, 64
          %s1555 = scalar_lea.hbm %s3, %s1554
          %s1556 = sshll.u32 %s1541, 4
          %s1557 = int_to_ptr.vmem [resolvable:$true] %s1556
          %1562 = dma.vmem_to_hbm [thread:$0]  %s1557, 512, %s1555, %s1538, 64, 128, 4
        $region52: #{tpu_custom_call.1} parent=31 // pred_fallthru
          _
      $region32: #{tpu_custom_call.1} parent=5 // pred_fallthru
        _
      %p1563 = scmp.le.s32.totalorder 2, %s18
      // Predicated region
      $region53: #{tpu_custom_call.1} parent=5 // pred_check
        %p1564 = pneg %p1563
      $region54: #{tpu_custom_call.1} parent=5 // pred_check_branch
        %1566 = sbr.rel (%p1564) target = $region56
      $region55: #{tpu_custom_call.1} parent=5 // pred_region
        %s1567 = ssub.s32 %s18, 2
        // Predicated region
        $region57: #{tpu_custom_call.1} parent=55 // pred_check
          %p1568 = pneg %p153
        $region58: #{tpu_custom_call.1} parent=55 // pred_check_branch
          %1570 = sbr.rel (%p1568) target = $region60
        $region59: #{tpu_custom_call.1} parent=55 // pred_region
          %s1571 = sand.u32 %s138, 1
          %s1572 = scalar_lea.sflag [#allocation6], %s1571
          %s1573 = sand.u32 %s138, 1
          %s1574 = smul.addr %s1573, 32
          %s1575 = scalar_lea.vmem [#allocation10], %s1574
          %1576 = dma.done %s1572, 512
        $region60: #{tpu_custom_call.1} parent=55 // pred_fallthru
          _
      $region56: #{tpu_custom_call.1} parent=5 // pred_fallthru
        _
    $region6: #{tpu_custom_call.1} parent=1 // loop_footer
      %s22 = sadd.s32 1, %s18
    $region7: #{tpu_custom_call.1} parent=1 // loop_footer_branch
      %17 = sbr.rel target = $region3
    $region8: #{tpu_custom_call.1} parent=1 // loop_exit
      _
    %1577 = vsyncpa [#allocation5], 1
    %s1578 = scalar_lea.sflag [#allocation5], 1
    %1579 = vsyncpa %s1578, 1
    %1580 = vsyncpa [#allocation8], 1
    %s1581 = scalar_lea.sflag [#allocation8], 1
    %1582 = vsyncpa %s1581, 1
    %1583 = vsyncpa [#allocation6], 1
    %s1584 = scalar_lea.sflag [#allocation6], 1
    %1585 = vsyncpa %s1584, 1

</llo_original>
